<compile_context>
chip_gen: v5e
topology: v5e:2x2
jax: 0.10.0
libtpu: 0.0.40
codegen_flags: <defaults>
</compile_context>

<pallas_src>
import math
import jax
import jax.numpy as jnp
from jax.experimental import pallas as pl
from jax.experimental.pallas import tpu as pltpu


def _round_up(x, m):
    return (x + m - 1) // m * m


_MIB = 1024 * 1024


def _tpu_vmem_capacity_bytes():
    """Per-core VMEM capacity; conservative (v7x-sized) fallback if the query fails."""
    try:
        info = pltpu.get_tpu_info()
        cap = int(getattr(info, "vmem_capacity_bytes", 0))
        if cap > 0:
            return cap
    except Exception:
        pass
    return 64 * _MIB  # conservative: v7x per-TC VMEM


def _estimate_layer_vmem_bytes(Np, Fp, Hp, tm, act_itemsize, adj_itemsize,
                               single_buffer_constants):
    """Rough VMEM footprint of one layer's pallas_call (I/O buffers + temps)."""
    const_bufs = 1 if single_buffer_constants else 2
    io = (2 * tm * Np * adj_itemsize                 # adj row block, double buffered
          + const_bufs * Np * Fp * act_itemsize      # full activation, resident
          + const_bufs * 2 * Fp * Hp * act_itemsize  # full weight, resident
          + 2 * tm * Hp * act_itemsize)              # output block, double buffered
    temps = (tm * Np * act_itemsize                  # dequantized adj block (int8 path)
             + tm * Fp * 4                           # support (f32)
             + tm * Fp * act_itemsize                # support cast for 2nd dot
             + tm * Hp * 4)                          # f32 accumulator
    return io + temps


def _choose_tm(Np, Fp, Hp, act_itemsize, adj_itemsize, vmem_budget,
               prefer_even_blocks, single_buffer_constants):
    """Largest MXU-friendly row tile fitting the budget; on multi-TC parts
    prefer an even block count so the 'parallel' axis splits evenly."""
    fitting = [tm for tm in (512, 256, 128)
               if Np % tm == 0 and
               _estimate_layer_vmem_bytes(Np, Fp, Hp, tm, act_itemsize,
                                          adj_itemsize,
                                          single_buffer_constants) <= vmem_budget]
    if not fitting:
        # TODO(synk): K-chunked 2-D grid over the node dim with an f32
        # accumulator scratch once the resident (Np, Fp) activation itself
        # no longer fits in VMEM (mandatory for very large graphs on v7x).
        raise ValueError(
            f"Graph too large for the single-pass layout: resident activations "
            f"({Np}x{Fp}) + weights exceed the VMEM budget ({vmem_budget} bytes).")
    if prefer_even_blocks:
        even = [tm for tm in fitting if (Np // tm) >= 2 and (Np // tm) % 2 == 0]
        if even:
            return even[0]
    return fitting[0]


def make_gcn_sage_layer(Np, Fp, Hp, tm, *, dtype, adj_dtype, adj_scale,
                        single_buffer_constants, vmem_limit_cap):
    """One GraphSAGE-style GraphConvolution + ReLU as a pallas_call.

    Each grid step computes `tm` output rows:
        relu( x_rows @ W[:Fp] + (adj_rows @ x_full) @ W[Fp:] )
    All shapes are padded: Np, Fp, Hp are multiples of 128 (lane-dense).
    """
    assert Np % tm == 0 and tm % 8 == 0
    assert Fp % 128 == 0 and Hp % 128 == 0
    act_itemsize = jnp.dtype(dtype).itemsize
    adj_itemsize = jnp.dtype(adj_dtype).itemsize
    dequant = adj_scale is not None

    def kernel(adj_ref, xfull_ref, w_ref, o_ref):
        i = pl.program_id(0)
        row0 = pl.multiple_of(i * tm, tm)

        adj_blk = adj_ref[...]
        if dequant:
            adj_blk = adj_blk.astype(dtype)          # int8 -> bf16 on the VPU
        # Neighborhood aggregation for this row block: (tm, Np) @ (Np, Fp), f32 acc.
        support = jnp.dot(adj_blk, xfull_ref[...],
                          preferred_element_type=jnp.float32)
        if dequant:
            support = support * jnp.float32(adj_scale)  # fold quant scale on (tm, Fp)

        # "Self" rows of this block come from the resident activation
        # (no separate HBM stream for them).
        x_self = xfull_ref[pl.ds(row0, tm), :]

        # Projection as two dots against static weight slices (no concat temp).
        out = jnp.dot(x_self, w_ref[0:Fp, :], preferred_element_type=jnp.float32)
        out = out + jnp.dot(support.astype(dtype), w_ref[Fp:2 * Fp, :],
                            preferred_element_type=jnp.float32)
        o_ref[...] = jnp.maximum(out, 0.0).astype(o_ref.dtype)

    if single_buffer_constants:
        # Constant-index blocks are fetched once; don't double-buffer them.
        xfull_spec = pl.BlockSpec((Np, Fp), lambda i: (0, 0),
                                  pipeline_mode=pl.Buffered(1))
        w_spec = pl.BlockSpec((2 * Fp, Hp), lambda i: (0, 0),
                              pipeline_mode=pl.Buffered(1))
    else:
        xfull_spec = pl.BlockSpec((Np, Fp), lambda i: (0, 0))
        w_spec = pl.BlockSpec((2 * Fp, Hp), lambda i: (0, 0))

    vmem_est = _estimate_layer_vmem_bytes(Np, Fp, Hp, tm, act_itemsize,
                                          adj_itemsize, single_buffer_constants)
    vmem_limit = int(min(vmem_limit_cap, max(2 * vmem_est, 16 * _MIB)))

    cost = pl.CostEstimate(
        flops=2 * Np * Np * Fp + 2 * Np * (2 * Fp) * Hp,
        transcendentals=0,
        bytes_accessed=(Np * Np * adj_itemsize
                        + (Np * Fp + 2 * Fp * Hp + Np * Hp) * act_itemsize),
    )

    return pl.pallas_call(
        kernel,
        out_shape=jax.ShapeDtypeStruct((Np, Hp), dtype),
        grid=(Np // tm,),
        in_specs=[
            pl.BlockSpec((tm, Np), lambda i: (i, 0)),   # adj row block (streamed)
            xfull_spec,                                  # full activation (resident)
            w_spec,                                      # full weight (resident)
        ],
        out_specs=pl.BlockSpec((tm, Hp), lambda i: (i, 0)),
        compiler_params=pltpu.CompilerParams(
            dimension_semantics=("parallel",),
            vmem_limit_bytes=vmem_limit),
        cost_estimate=cost,
    )


def prepare_adjacency(adj, N=None, dtype=jnp.bfloat16, adj_format="bf16"):
    """Pad (and optionally int8-quantize) the dense adjacency ONCE.

    Build at model-setup time and reuse across forward calls / layers; the
    per-forward pad + cast was on the order of a full layer's HBM traffic.
    Returns (adj_padded, dequant_scale_or_None).
    """
    N = adj.shape[0] if N is None else N
    Np = _round_up(N, 128)
    if adj_format == "int8":
        # Row-normalized adjacency entries lie in [0, 1]; a single scale of
        # 1/127 keeps exact zeros exact and bounds per-entry error by 0.5/127.
        # Dequant happens on the VPU in-kernel, so the MXU still sees bf16
        # (works on v7x, whose MXU has no int path).
        q = jnp.clip(jnp.round(adj.astype(jnp.float32) * 127.0), 0, 127).astype(jnp.int8)
        adj_p = jnp.zeros((Np, Np), jnp.int8).at[:N, :N].set(q)
        return adj_p, 1.0 / 127.0
    adj_p = jnp.zeros((Np, Np), dtype).at[:N, :N].set(adj.astype(dtype))
    return adj_p, None


def _pad_weight(w, f_in, f_in_p, h_p, dtype):
    """(2*f_in, h) -> (2*f_in_p, h_p). Zero rows/cols line up with the zero
    padding of x / support, so the padded matmul is exact."""
    h = w.shape[1]
    wp = jnp.zeros((2 * f_in_p, h_p), dtype=dtype)
    wp = wp.at[0:f_in, 0:h].set(w[0:f_in].astype(dtype))
    wp = wp.at[f_in_p:f_in_p + f_in, 0:h].set(w[f_in:2 * f_in].astype(dtype))
    return wp


def init_graphsage_params(key, nfeat, nhid, nlayer):
    """Matches GraphConvolution.reset_parameters: uniform(-stdv, stdv),
    stdv = 1/sqrt(out_features)."""
    weights = []
    in_dims = [nfeat] + [nhid] * (nlayer - 1)
    stdv = 1.0 / math.sqrt(nhid)
    for d_in in in_dims:
        key, sub = jax.random.split(key)
        w = jax.random.uniform(sub, (2 * d_in, nhid),
                               minval=-stdv, maxval=stdv, dtype=jnp.float32)
        weights.append(w)
    return weights


def embedding_graphsage_forward(x, adj_p, adj_scale, weights, dtype=jnp.bfloat16,
                                single_buffer_constants=True):
    """Runs nlayer GraphConvolution+ReLU layers, each as one Pallas kernel.

    `adj_p` is the pre-padded (and optionally int8) adjacency from
    prepare_adjacency (built once, reused).  Works in a zero-padded,
    lane-aligned space; padding is exact and sliced off at the end.
    Activations stay in bf16 between layers with f32 MXU accumulation.
    """
    N, F = x.shape
    Np = adj_p.shape[0]
    nhid = weights[-1].shape[1]
    assert Np % 128 == 0 and Np >= N

    Fp = _round_up(F, 128)
    Hp = _round_up(nhid, 128)
    act_itemsize = jnp.dtype(dtype).itemsize
    adj_itemsize = jnp.dtype(adj_p.dtype).itemsize

    cap = _tpu_vmem_capacity_bytes()
    vmem_budget = int(0.75 * cap)          # tile-selection budget (generation-aware)
    vmem_limit_cap = cap - 8 * _MIB        # leave headroom for Mosaic internal scratch
    # Heuristic: small per-core VMEM => v7x-like part with 2 TensorCores that
    # share the "parallel" grid axis, so prefer an even number of row blocks.
    prefer_even_blocks = cap <= 96 * _MIB

    cur = jnp.zeros((Np, Fp), dtype).at[:N, :F].set(x.astype(dtype))
    cur_fp = Fp
    for w in weights:
        f_in = w.shape[0] // 2
        wp = _pad_weight(w, f_in, cur_fp, Hp, dtype)
        tm = _choose_tm(Np, cur_fp, Hp, act_itemsize, adj_itemsize, vmem_budget,
                        prefer_even_blocks, single_buffer_constants)
        layer = make_gcn_sage_layer(
            Np, cur_fp, Hp, tm, dtype=dtype, adj_dtype=adj_p.dtype,
            adj_scale=adj_scale,
            single_buffer_constants=single_buffer_constants,
            vmem_limit_cap=vmem_limit_cap)
        cur = layer(adj_p, cur, wp)
        cur_fp = Hp

    return cur[:N, :nhid].astype(jnp.float32)


def reference_forward(x, adj, weights):
    """Pure-JAX f32 reference mirroring the PyTorch module exactly."""
    for w in weights:
        support = adj @ x
        cat = jnp.concatenate([x, support], axis=1)
        x = jax.nn.relu(cat @ w)
    return x


if __name__ == "__main__":
    # Small but padding-exercising shapes: N=200 nodes, nfeat=100, nhid=64,
    # nlayer=2 (padded internally to Np=256, Fp=128, Hp=128).
    N, nfeat, nhid, nlayer = 200, 100, 64, 2

    key = jax.random.PRNGKey(0)
    k_x, k_adj, k_w = jax.random.split(key, 3)

    x = jax.random.normal(k_x, (N, nfeat), dtype=jnp.float32)
    # Dense row-normalized adjacency (self-loops + random edges).
    a = (jax.random.uniform(k_adj, (N, N)) < 0.05).astype(jnp.float32)
    a = a + jnp.eye(N, dtype=jnp.float32)
    adj = a / jnp.sum(a, axis=1, keepdims=True)

    weights = init_graphsage_params(k_w, nfeat, nhid, nlayer)
    ref = reference_forward(x, adj, weights)

    def run(adj_p, adj_scale):
        try:
            return jax.block_until_ready(
                embedding_graphsage_forward(x, adj_p, adj_scale, weights))
        except Exception:
            # Fallback in case this jax build rejects pl.Buffered(1) as a
            # pipeline_mode for the resident (constant-index) blocks.
            return jax.block_until_ready(
                embedding_graphsage_forward(x, adj_p, adj_scale, weights,
                                            single_buffer_constants=False))

    # bf16 adjacency path (padded adjacency built once, outside the forward).
    adj_bf16, _ = prepare_adjacency(adj, N)
    out = run(adj_bf16, None)
    assert out.shape == (N, nhid)
    # bf16 matmul inputs with f32 accumulation -> compare to the f32 reference
    # with a loosened tolerance.
    assert jnp.allclose(out, ref, atol=5e-2, rtol=5e-2), "bf16 path mismatch vs reference"

    # 8-bit adjacency path (halves the dominant O(N^2) HBM stream); checked
    # with a relative-Frobenius tolerance appropriate for int8 quantization.
    adj_i8, scale = prepare_adjacency(adj, N, adj_format="int8")
    out_i8 = run(adj_i8, scale)
    rel = float(jnp.linalg.norm(out_i8 - ref) / jnp.linalg.norm(ref))
    assert rel < 0.1, f"int8-adjacency path relative error too large: {rel}"

    print("KERNEL_OK")
</pallas_src>

<mosaic_0001>
module attributes {stable_mosaic.version = 11 : i64} {
  func.func @kernel(%arg0: i32, %arg1: memref<128x256xbf16, #tpu.memory_space<vmem>>, %arg2: memref<256x128xbf16, #tpu.memory_space<vmem>>, %arg3: memref<256x128xbf16, #tpu.memory_space<vmem>>, %arg4: memref<128x128xbf16, #tpu.memory_space<vmem>>) attributes {dimension_semantics = [#tpu.dimension_semantics<parallel>], iteration_bounds = array<i64: 2>, scalar_prefetch = 0 : i64, scratch_operands = 0 : i64, tpu.core_type = #tpu.core_type<tc>, window_params = [{transform_indices = @transform_0, window_bounds = array<i64: 128, 256>}, {pipeline_mode = #tpu.pipeline_mode<synchronous>, transform_indices = @transform_1, window_bounds = array<i64: 256, 128>}, {pipeline_mode = #tpu.pipeline_mode<synchronous>, transform_indices = @transform_2, window_bounds = array<i64: 256, 128>}, {transform_indices = @transform_3, window_bounds = array<i64: 128, 128>}]} {
    %c128_i32 = arith.constant 128 : i32
    %0 = arith.muli %arg0, %c128_i32 : i32
    %1 = tpu.assume_multiple %0, 128 : i32
    %c0 = arith.constant 0 : index
    %c0_0 = arith.constant 0 : index
    %2 = vector.load %arg1[%c0, %c0_0] : memref<128x256xbf16, #tpu.memory_space<vmem>>, vector<128x256xbf16>
    %c0_1 = arith.constant 0 : index
    %c0_2 = arith.constant 0 : index
    %3 = vector.load %arg2[%c0_1, %c0_2] : memref<256x128xbf16, #tpu.memory_space<vmem>>, vector<256x128xbf16>
    %cst = arith.constant dense<0.000000e+00> : vector<128x128xf32>
    %4 = tpu.matmul %2, %3, %cst {dimension_numbers = #tpu.dot_dimension_numbers<[1], [0], [0], [1], [0, 0, 1, 1], [], []>} : vector<128x256xbf16>, vector<256x128xbf16>, vector<128x128xf32> -> vector<128x128xf32>
    %5 = arith.index_cast %1 : i32 to index
    %c0_3 = arith.constant 0 : index
    %6 = vector.load %arg2[%5, %c0_3] : memref<256x128xbf16, #tpu.memory_space<vmem>>, vector<128x128xbf16>
    %c0_4 = arith.constant 0 : index
    %c0_5 = arith.constant 0 : index
    %7 = vector.load %arg3[%c0_4, %c0_5] : memref<256x128xbf16, #tpu.memory_space<vmem>>, vector<128x128xbf16>
    %cst_6 = arith.constant dense<0.000000e+00> : vector<128x128xf32>
    %8 = tpu.matmul %6, %7, %cst_6 {dimension_numbers = #tpu.dot_dimension_numbers<[1], [0], [0], [1], [0, 0, 1, 1], [], []>} : vector<128x128xbf16>, vector<128x128xbf16>, vector<128x128xf32> -> vector<128x128xf32>
    %9 = arith.truncf %4 : vector<128x128xf32> to vector<128x128xbf16>
    %c128 = arith.constant 128 : index
    %c0_7 = arith.constant 0 : index
    %10 = vector.load %arg3[%c128, %c0_7] : memref<256x128xbf16, #tpu.memory_space<vmem>>, vector<128x128xbf16>
    %cst_8 = arith.constant dense<0.000000e+00> : vector<128x128xf32>
    %11 = tpu.matmul %9, %10, %cst_8 {dimension_numbers = #tpu.dot_dimension_numbers<[1], [0], [0], [1], [0, 0, 1, 1], [], []>} : vector<128x128xbf16>, vector<128x128xbf16>, vector<128x128xf32> -> vector<128x128xf32>
    %12 = arith.addf %8, %11 : vector<128x128xf32>
    %cst_9 = arith.constant 0.000000e+00 : f32
    %13 = vector.broadcast %cst_9 : f32 to vector<128x128xf32>
    %14 = arith.maximumf %12, %13 : vector<128x128xf32>
    %15 = arith.truncf %14 : vector<128x128xf32> to vector<128x128xbf16>
    %c0_10 = arith.constant 0 : index
    %c0_11 = arith.constant 0 : index
    %16 = vector.load %arg4[%c0_10, %c0_11] : memref<128x128xbf16, #tpu.memory_space<vmem>>, vector<128x128xbf16>
    tpu.vector_store %arg4[%c0_10, %c0_11], %15 {strides = array<i32>} : memref<128x128xbf16, #tpu.memory_space<vmem>>, vector<128x128xbf16>,
    return
  }
  func.func @transform_0(%arg0: i32) -> (i32, i32) {
    %c0_i32 = arith.constant 0 : i32
    %c0_i32_0 = arith.constant 0 : i32
    return %arg0, %c0_i32 : i32, i32
  }
  func.func @transform_1(%arg0: i32) -> (i32, i32) {
    %c0_i32 = arith.constant 0 : i32
    %c0_i32_0 = arith.constant 0 : i32
    %c0_i32_1 = arith.constant 0 : i32
    return %c0_i32, %c0_i32_0 : i32, i32
  }
  func.func @transform_2(%arg0: i32) -> (i32, i32) {
    %c0_i32 = arith.constant 0 : i32
    %c0_i32_0 = arith.constant 0 : i32
    %c0_i32_1 = arith.constant 0 : i32
    return %c0_i32, %c0_i32_0 : i32, i32
  }
  func.func @transform_3(%arg0: i32) -> (i32, i32) {
    %c0_i32 = arith.constant 0 : i32
    %c0_i32_0 = arith.constant 0 : i32
    return %arg0, %c0_i32 : i32, i32
  }
}

module attributes {stable_mosaic.version = 11 : i64} {
  func.func @kernel(%arg0: i32, %arg1: memref<128x256xbf16, #tpu.memory_space<vmem>>, %arg2: memref<256x128xbf16, #tpu.memory_space<vmem>>, %arg3: memref<256x128xbf16, #tpu.memory_space<vmem>>, %arg4: memref<128x128xbf16, #tpu.memory_space<vmem>>) attributes {dimension_semantics = [#tpu.dimension_semantics<parallel>], iteration_bounds = array<i64: 2>, scalar_prefetch = 0 : i64, scratch_operands = 0 : i64, tpu.core_type = #tpu.core_type<tc>, window_params = [{transform_indices = @transform_0, window_bounds = array<i64: 128, 256>}, {pipeline_mode = #tpu.pipeline_mode<synchronous>, transform_indices = @transform_1, window_bounds = array<i64: 256, 128>}, {pipeline_mode = #tpu.pipeline_mode<synchronous>, transform_indices = @transform_2, window_bounds = array<i64: 256, 128>}, {transform_indices = @transform_3, window_bounds = array<i64: 128, 128>}]} {
    %c128_i32 = arith.constant 128 : i32
    %0 = arith.muli %arg0, %c128_i32 : i32
    %1 = tpu.assume_multiple %0, 128 : i32
    %c0 = arith.constant 0 : index
    %c0_0 = arith.constant 0 : index
    %2 = vector.load %arg1[%c0, %c0_0] : memref<128x256xbf16, #tpu.memory_space<vmem>>, vector<128x256xbf16>
    %c0_1 = arith.constant 0 : index
    %c0_2 = arith.constant 0 : index
    %3 = vector.load %arg2[%c0_1, %c0_2] : memref<256x128xbf16, #tpu.memory_space<vmem>>, vector<256x128xbf16>
    %cst = arith.constant dense<0.000000e+00> : vector<128x128xf32>
    %4 = tpu.matmul %2, %3, %cst {dimension_numbers = #tpu.dot_dimension_numbers<[1], [0], [0], [1], [0, 0, 1, 1], [], []>} : vector<128x256xbf16>, vector<256x128xbf16>, vector<128x128xf32> -> vector<128x128xf32>
    %5 = arith.index_cast %1 : i32 to index
    %c0_3 = arith.constant 0 : index
    %6 = vector.load %arg2[%5, %c0_3] : memref<256x128xbf16, #tpu.memory_space<vmem>>, vector<128x128xbf16>
    %c0_4 = arith.constant 0 : index
    %c0_5 = arith.constant 0 : index
    %7 = vector.load %arg3[%c0_4, %c0_5] : memref<256x128xbf16, #tpu.memory_space<vmem>>, vector<128x128xbf16>
    %cst_6 = arith.constant dense<0.000000e+00> : vector<128x128xf32>
    %8 = tpu.matmul %6, %7, %cst_6 {dimension_numbers = #tpu.dot_dimension_numbers<[1], [0], [0], [1], [0, 0, 1, 1], [], []>} : vector<128x128xbf16>, vector<128x128xbf16>, vector<128x128xf32> -> vector<128x128xf32>
    %9 = arith.truncf %4 : vector<128x128xf32> to vector<128x128xbf16>
    %c128 = arith.constant 128 : index
    %c0_7 = arith.constant 0 : index
    %10 = vector.load %arg3[%c128, %c0_7] : memref<256x128xbf16, #tpu.memory_space<vmem>>, vector<128x128xbf16>
    %cst_8 = arith.constant dense<0.000000e+00> : vector<128x128xf32>
    %11 = tpu.matmul %9, %10, %cst_8 {dimension_numbers = #tpu.dot_dimension_numbers<[1], [0], [0], [1], [0, 0, 1, 1], [], []>} : vector<128x128xbf16>, vector<128x128xbf16>, vector<128x128xf32> -> vector<128x128xf32>
    %12 = arith.addf %8, %11 : vector<128x128xf32>
    %cst_9 = arith.constant 0.000000e+00 : f32
    %13 = vector.broadcast %cst_9 : f32 to vector<128x128xf32>
    %14 = arith.maximumf %12, %13 : vector<128x128xf32>
    %15 = arith.truncf %14 : vector<128x128xf32> to vector<128x128xbf16>
    %c0_10 = arith.constant 0 : index
    %c0_11 = arith.constant 0 : index
    %16 = vector.load %arg4[%c0_10, %c0_11] : memref<128x128xbf16, #tpu.memory_space<vmem>>, vector<128x128xbf16>
    tpu.vector_store %arg4[%c0_10, %c0_11], %15 {strides = array<i32>} : memref<128x128xbf16, #tpu.memory_space<vmem>>, vector<128x128xbf16>,
    return
  }
  func.func @transform_0(%arg0: i32) -> (i32, i32) {
    %c0_i32 = arith.constant 0 : i32
    %c0_i32_0 = arith.constant 0 : i32
    return %arg0, %c0_i32 : i32, i32
  }
  func.func @transform_1(%arg0: i32) -> (i32, i32) {
    %c0_i32 = arith.constant 0 : i32
    %c0_i32_0 = arith.constant 0 : i32
    %c0_i32_1 = arith.constant 0 : i32
    return %c0_i32, %c0_i32_0 : i32, i32
  }
  func.func @transform_2(%arg0: i32) -> (i32, i32) {
    %c0_i32 = arith.constant 0 : i32
    %c0_i32_0 = arith.constant 0 : i32
    %c0_i32_1 = arith.constant 0 : i32
    return %c0_i32, %c0_i32_0 : i32, i32
  }
  func.func @transform_3(%arg0: i32) -> (i32, i32) {
    %c0_i32 = arith.constant 0 : i32
    %c0_i32_0 = arith.constant 0 : i32
    return %arg0, %c0_i32 : i32, i32
  }
}

</mosaic_0001>

<llo_original>
// kernel: tpu_custom_call.1
$region0: #{tpu_custom_call.1}
  #allocation0 [shape = 'u32[]', space=smem, size = 0x4, offset = 0x4, fixed_abs, tag = 'smem constant byte address 0x4 - core index']
  #allocation1 [shape = 'u32[72,128]{1,0:T(1,128)}', space=vmem, size = 0x9000, scoped, tag = 'internal scratch']
  %s0 = inlined_call_operand.hbm [shape: bf16[256,256], index: 0, kind: input, shape index: {}]
  %s1 = inlined_call_operand.hbm [shape: bf16[256,128], index: 1, kind: input, shape index: {}]
  %s2 = inlined_call_operand.hbm [shape: bf16[256,128], index: 2, kind: input, shape index: {}]
  %s3 = inlined_call_operand.hbm [shape: bf16[256,128], index: 3, kind: output, shape index: {}]
  %s4 = sld [smem:[#allocation0]]
  $region57: #{tpu_custom_call.1} parent=0
    _
  %s6 = ssub.s32 1, %s4
  %s7 = scalar_select 0, %s6, %s4
  $region1: #{tpu_custom_call.1} parent=0
    #allocation2 [shape = 'u8[131072]{0}', space=vmem, size = 0x20000, scoped, tag = 'input window, operand 0']
    #allocation3 [shape = 's32[2]{0}', space=sflag, size = 0x8, scoped, tag = 'scoped memory for tpu_custom_call.1']
    #allocation4 [shape = 's32[2]{0}', space=sflag, size = 0x8, scoped, tag = 'scoped memory for tpu_custom_call.1']
    #allocation5 [shape = 'u8[65536]{0}', space=vmem, size = 0x10000, scoped, tag = 'input window, operand 1, single buffered']
    #allocation6 [shape = 's32[1]{0}', space=sflag, size = 0x4, scoped, tag = 'scoped memory for tpu_custom_call.1']
    #allocation7 [shape = 'u8[65536]{0}', space=vmem, size = 0x10000, scoped, tag = 'input window, operand 2, single buffered']
    #allocation8 [shape = 'u8[65536]{0}', space=vmem, size = 0x10000, scoped, tag = 'output window, operand 0']
    %8 = vsyncpa [#allocation3], 0
    %s9 = scalar_lea.sflag [#allocation3], 1
    %10 = vsyncpa %s9, 0
    %11 = vsyncpa [#allocation6], 0
    %12 = vsyncpa [#allocation4], 0
    %s13 = scalar_lea.sflag [#allocation4], 1
    %14 = vsyncpa %s13, 0
    loop: start=0, step=1, limit=4
    $region2: #{tpu_custom_call.1} parent=1 // loop_pre_header
      _
    $region3: #{tpu_custom_call.1} parent=1 // loop_header
      %s16 = sphi 0, %s20
      %p17 = scmp.ge.s32.totalorder %s16, 4
      %s26 = sphi 0, %s28
      %s29 = sphi 0, %s26
      %s30 = sphi 0, %s29
      %s46 = sphi 0, %s30
      %s50 = sphi 0, %s50
      %s52 = sphi 0, %s50
      %s53 = sphi 0, %s52
      %s67 = sphi 0, %s53
      %s71 = sphi 0, %s71
      %s73 = sphi 0, %s71
      %s74 = sphi 0, %s73
      %s88 = sphi 0, %s74
      %s94 = sphi 0, %s96
      %s97 = sphi 0, %s94
      %s98 = sphi 0, %s97
      %s114 = sphi 0, %s98
    $region4: #{tpu_custom_call.1} parent=1 // loop_header_branch
      %19 = sbr.rel (%p17) target = $region8
    $region5: #{tpu_custom_call.1} parent=1 // loop_body
      %s21 = ssub.s32 %s16, 1
      %s22 = ssub.s32 %s16, 2
      %s23 = sadd.s32 %s16, 1
      %s24 = ssub.s32 %s16, %s23
      %p25 = scmp.eq.s32.totalorder %s24, 0
      %s27 = sadd.s32 %s26, 1
      %s28 = scalar_select %p25, %s26, %s27
      %p31 = pneg %p25
      %p32 = scmp.eq.s32.totalorder %s16, 1
      %p33 = por %p31, %p32
      %p34 = scmp.ne.s32.totalorder %s26, %s29
      %p35 = scmp.eq.s32.totalorder %s16, 0
      %p36 = por %p34, %p35
      %p37 = scmp.ne.s32.totalorder %s26, %s29
      %p38 = scmp.eq.s32.totalorder %s21, 1
      %p39 = por %p37, %p38
      %p40 = scmp.ne.s32.totalorder %s29, %s30
      %p41 = scmp.eq.s32.totalorder %s21, 0
      %p42 = por %p40, %p41
      %p43 = scmp.ne.s32.totalorder %s29, %s30
      %p44 = scmp.eq.s32.totalorder %s22, 1
      %p45 = por %p43, %p44
      %p47 = scmp.ne.s32.totalorder %s30, %s46
      %p48 = scmp.eq.s32.totalorder %s22, 0
      %p49 = por %p47, %p48
      %s51 = sadd.s32 %s50, 1
      %p54 = scmp.eq.s32.totalorder %s16, 1
      %p55 = scmp.ne.s32.totalorder %s50, %s52
      %p56 = scmp.eq.s32.totalorder %s16, 0
      %p57 = por %p55, %p56
      %p58 = scmp.ne.s32.totalorder %s50, %s52
      %p59 = scmp.eq.s32.totalorder %s21, 1
      %p60 = por %p58, %p59
      %p61 = scmp.ne.s32.totalorder %s52, %s53
      %p62 = scmp.eq.s32.totalorder %s21, 0
      %p63 = por %p61, %p62
      %p64 = scmp.ne.s32.totalorder %s52, %s53
      %p65 = scmp.eq.s32.totalorder %s22, 1
      %p66 = por %p64, %p65
      %p68 = scmp.ne.s32.totalorder %s53, %s67
      %p69 = scmp.eq.s32.totalorder %s22, 0
      %p70 = por %p68, %p69
      %s72 = sadd.s32 %s71, 1
      %p75 = scmp.eq.s32.totalorder %s16, 1
      %p76 = scmp.ne.s32.totalorder %s71, %s73
      %p77 = scmp.eq.s32.totalorder %s16, 0
      %p78 = por %p76, %p77
      %p79 = scmp.ne.s32.totalorder %s71, %s73
      %p80 = scmp.eq.s32.totalorder %s21, 1
      %p81 = por %p79, %p80
      %p82 = scmp.ne.s32.totalorder %s73, %s74
      %p83 = scmp.eq.s32.totalorder %s21, 0
      %p84 = por %p82, %p83
      %p85 = scmp.ne.s32.totalorder %s73, %s74
      %p86 = scmp.eq.s32.totalorder %s22, 1
      %p87 = por %p85, %p86
      %p89 = scmp.ne.s32.totalorder %s74, %s88
      %p90 = scmp.eq.s32.totalorder %s22, 0
      %p91 = por %p89, %p90
      %s92 = ssub.s32 %s16, %s23
      %p93 = scmp.eq.s32.totalorder %s92, 0
      %s95 = sadd.s32 %s94, 1
      %s96 = scalar_select %p93, %s94, %s95
      %p99 = pneg %p93
      %p100 = scmp.eq.s32.totalorder %s16, 1
      %p101 = por %p99, %p100
      %p102 = scmp.ne.s32.totalorder %s94, %s97
      %p103 = scmp.eq.s32.totalorder %s16, 0
      %p104 = por %p102, %p103
      %p105 = scmp.ne.s32.totalorder %s94, %s97
      %p106 = scmp.eq.s32.totalorder %s21, 1
      %p107 = por %p105, %p106
      %p108 = scmp.ne.s32.totalorder %s97, %s98
      %p109 = scmp.eq.s32.totalorder %s21, 0
      %p110 = por %p108, %p109
      %p111 = scmp.ne.s32.totalorder %s97, %s98
      %p112 = scmp.eq.s32.totalorder %s22, 1
      %p113 = por %p111, %p112
      %p115 = scmp.ne.s32.totalorder %s98, %s114
      %p116 = scmp.eq.s32.totalorder %s22, 0
      %p117 = por %p115, %p116
      %p118 = scmp.le.s32.totalorder 1, %s16
      %p119 = scmp.lt.s32.totalorder %s16, 3
      %p120 = pnand %p118, %p119
      %p121 = pneg %p120
      // Predicated region
      $region9: #{tpu_custom_call.1} parent=5 // pred_check
        _
      $region10: #{tpu_custom_call.1} parent=5 // pred_check_branch
        %123 = sbr.rel (%p120) target = $region12
      $region11: #{tpu_custom_call.1} parent=5 // pred_region
        %s124 = ssub.s32 %s16, 1
        // Predicated region
        $region13: #{tpu_custom_call.1} parent=11 // pred_check
          %p125 = pneg %p63
        $region14: #{tpu_custom_call.1} parent=11 // pred_check_branch
          %127 = sbr.rel (%p125) target = $region16
        $region15: #{tpu_custom_call.1} parent=11 // pred_region
          %129 = vsyncadd [#allocation6], 0
          %s130 = sshll.u32 %s1, 4
          %s131 = int_to_ptr.hbm [resolvable:$true] %s130
          %s132 = sshll.u32 [#allocation5], 4
          %s133 = int_to_ptr.vmem [resolvable:$true] %s132
          %138 = dma.hbm_to_vmem [thread:$0]  %s131, 2048, %s133, [#allocation6], 64, 64, 4
        $region16: #{tpu_custom_call.1} parent=11 // pred_fallthru
          _
        // Predicated region
        $region17: #{tpu_custom_call.1} parent=11 // pred_check
          %p139 = pneg %p84
        $region18: #{tpu_custom_call.1} parent=11 // pred_check_branch
          %141 = sbr.rel (%p139) target = $region20
        $region19: #{tpu_custom_call.1} parent=11 // pred_region
          %143 = vsyncadd [#allocation6], 0
          %s144 = sshll.u32 %s2, 4
          %s145 = int_to_ptr.hbm [resolvable:$true] %s144
          %s146 = sshll.u32 [#allocation7], 4
          %s147 = int_to_ptr.vmem [resolvable:$true] %s146
          %152 = dma.hbm_to_vmem [thread:$0]  %s145, 2048, %s147, [#allocation6], 64, 64, 4
        $region20: #{tpu_custom_call.1} parent=11 // pred_fallthru
          _
      $region12: #{tpu_custom_call.1} parent=5 // pred_fallthru
        _
      %p153 = scmp.lt.s32.totalorder %s16, 2
      // Predicated region
      $region21: #{tpu_custom_call.1} parent=5 // pred_check
        %p154 = pneg %p153
      $region22: #{tpu_custom_call.1} parent=5 // pred_check_branch
        %156 = sbr.rel (%p154) target = $region24
      $region23: #{tpu_custom_call.1} parent=5 // pred_region
        // Predicated region
        $region25: #{tpu_custom_call.1} parent=23 // pred_check
          %p157 = pneg %p36
        $region26: #{tpu_custom_call.1} parent=23 // pred_check_branch
          %159 = sbr.rel (%p157) target = $region28
        $region27: #{tpu_custom_call.1} parent=23 // pred_region
          %s160 = sand.u32 %s26, 1
          %s161 = scalar_lea.sflag [#allocation3], %s160
          %s162 = sand.u32 %s26, 1
          %s163 = smul.addr %s162, 128
          %s164 = scalar_lea.vmem [#allocation2], %s163
          %s165 = smul.u32 16, %s16
          %167 = vsyncadd %s161, 0
          %s168 = smul.addr %s165, 2
          %s169 = smul.addr %s168, 4
          %s170 = scalar_lea.hbm %s0, %s169
          %s171 = sshll.u32 %s170, 4
          %s172 = int_to_ptr.hbm [resolvable:$true] %s171
          %s173 = sshll.u32 %s164, 4
          %s174 = int_to_ptr.vmem [resolvable:$true] %s173
          %179 = dma.hbm_to_vmem [thread:$0]  %s172, 2048, %s174, %s161, 128, 128, 8
        $region28: #{tpu_custom_call.1} parent=23 // pred_fallthru
          _
      $region24: #{tpu_custom_call.1} parent=5 // pred_fallthru
        _
      %p180 = scmp.le.s32.totalorder 1, %s16
      %p181 = scmp.lt.s32.totalorder %s16, 3
      %p182 = pnand %p180, %p181
      %p183 = pneg %p182
      // Predicated region
      $region29: #{tpu_custom_call.1} parent=5 // pred_check
        _
      $region30: #{tpu_custom_call.1} parent=5 // pred_check_branch
        %185 = sbr.rel (%p182) target = $region32
      $region31: #{tpu_custom_call.1} parent=5 // pred_region
        %s186 = ssub.s32 %s16, 1
        %s187 = sand.u32 %s29, 1
        %s188 = scalar_lea.sflag [#allocation3], %s187
        %s189 = sand.u32 %s29, 1
        %s190 = smul.addr %s189, 128
        %s191 = scalar_lea.vmem [#allocation2], %s190
        // Predicated region
        $region33: #{tpu_custom_call.1} parent=31 // pred_check
          %p192 = pneg %p42
        $region34: #{tpu_custom_call.1} parent=31 // pred_check_branch
          %194 = sbr.rel (%p192) target = $region36
        $region35: #{tpu_custom_call.1} parent=31 // pred_region
          %196 = dma.done %s188, 2048
        $region36: #{tpu_custom_call.1} parent=31 // pred_fallthru
          _
        // Predicated region
        $region37: #{tpu_custom_call.1} parent=31 // pred_check
          %p197 = pneg %p63
        $region38: #{tpu_custom_call.1} parent=31 // pred_check_branch
          %199 = sbr.rel (%p197) target = $region40
        $region39: #{tpu_custom_call.1} parent=31 // pred_region
          %201 = dma.done [#allocation6], 2048
        $region40: #{tpu_custom_call.1} parent=31 // pred_fallthru
          _
        // Predicated region
        $region41: #{tpu_custom_call.1} parent=31 // pred_check
          %p202 = pneg %p84
        $region42: #{tpu_custom_call.1} parent=31 // pred_check_branch
          %204 = sbr.rel (%p202) target = $region44
        $region43: #{tpu_custom_call.1} parent=31 // pred_region
          %206 = dma.done [#allocation6], 2048
        $region44: #{tpu_custom_call.1} parent=31 // pred_fallthru
          _
        %s207 = sand.u32 %s29, 1
        %s208 = scalar_lea.sflag [#allocation3], %s207
        %s209 = sand.u32 %s29, 1
        %s210 = smul.addr %s209, 128
        %s211 = scalar_lea.vmem [#allocation2], %s210
        %p212 = pneg %p42
        %p213 = pneg %p39
        %p214 = pneg %p63
        %p215 = pneg %p60
        %p216 = pneg %p84
        %p217 = pneg %p81
        %p218 = pneg %p110
        %p219 = pneg %p107
        %s220 = sand.u32 %s97, 1
        %s221 = scalar_lea.sflag [#allocation4], %s220
        %s222 = sand.u32 %s97, 1
        %s223 = smul.addr %s222, 64
        %s224 = scalar_lea.vmem [#allocation8], %s223
        %s225 = smul.u32 16, %s21
        %s226 = smul.u32 16, %s21
        %s227 = smul.u32 %s21, 128
        %v228 = vld [vmem:[%s191] sm:$0xff]
        %v229 = vld [vmem:[%s191 + $0x8] sm:$0xff]
        %v230 = vld [vmem:[%s191 + $0x10] sm:$0xff]
        %v231 = vld [vmem:[%s191 + $0x18] sm:$0xff]
        %v232 = vld [vmem:[%s191 + $0x20] sm:$0xff]
        %v233 = vld [vmem:[%s191 + $0x28] sm:$0xff]
        %v234 = vld [vmem:[%s191 + $0x30] sm:$0xff]
        %v235 = vld [vmem:[%s191 + $0x38] sm:$0xff]
        %v236 = vld [vmem:[%s191 + $0x40] sm:$0xff]
        %v237 = vld [vmem:[%s191 + $0x48] sm:$0xff]
        %v238 = vld [vmem:[%s191 + $0x50] sm:$0xff]
        %v239 = vld [vmem:[%s191 + $0x58] sm:$0xff]
        %v240 = vld [vmem:[%s191 + $0x60] sm:$0xff]
        %v241 = vld [vmem:[%s191 + $0x68] sm:$0xff]
        %v242 = vld [vmem:[%s191 + $0x70] sm:$0xff]
        %v243 = vld [vmem:[%s191 + $0x78] sm:$0xff]
        %v244 = vld [vmem:[#allocation5] sm:$0xf]
        %v245 = vld [vmem:[#allocation5 + $0x4] sm:$0xf]
        %v246 = vld [vmem:[#allocation5 + $0x8] sm:$0xf]
        %v247 = vld [vmem:[#allocation5 + $0xc] sm:$0xf]
        %v248 = vld [vmem:[#allocation5 + $0x10] sm:$0xf]
        %v249 = vld [vmem:[#allocation5 + $0x14] sm:$0xf]
        %v250 = vld [vmem:[#allocation5 + $0x18] sm:$0xf]
        %v251 = vld [vmem:[#allocation5 + $0x1c] sm:$0xf]
        %v252 = vld [vmem:[#allocation5 + $0x20] sm:$0xf]
        %v253 = vld [vmem:[#allocation5 + $0x24] sm:$0xf]
        %v254 = vld [vmem:[#allocation5 + $0x28] sm:$0xf]
        %v255 = vld [vmem:[#allocation5 + $0x2c] sm:$0xf]
        %v256 = vld [vmem:[#allocation5 + $0x30] sm:$0xf]
        %v257 = vld [vmem:[#allocation5 + $0x34] sm:$0xf]
        %v258 = vld [vmem:[#allocation5 + $0x38] sm:$0xf]
        %v259 = vld [vmem:[#allocation5 + $0x3c] sm:$0xf]
        %v260 = vld [vmem:[#allocation5 + $0x40] sm:$0xf]
        %v261 = vld [vmem:[#allocation5 + $0x44] sm:$0xf]
        %v262 = vld [vmem:[#allocation5 + $0x48] sm:$0xf]
        %v263 = vld [vmem:[#allocation5 + $0x4c] sm:$0xf]
        %v264 = vld [vmem:[#allocation5 + $0x50] sm:$0xf]
        %v265 = vld [vmem:[#allocation5 + $0x54] sm:$0xf]
        %v266 = vld [vmem:[#allocation5 + $0x58] sm:$0xf]
        %v267 = vld [vmem:[#allocation5 + $0x5c] sm:$0xf]
        %v268 = vld [vmem:[#allocation5 + $0x60] sm:$0xf]
        %v269 = vld [vmem:[#allocation5 + $0x64] sm:$0xf]
        %v270 = vld [vmem:[#allocation5 + $0x68] sm:$0xf]
        %v271 = vld [vmem:[#allocation5 + $0x6c] sm:$0xf]
        %v272 = vld [vmem:[#allocation5 + $0x70] sm:$0xf]
        %v273 = vld [vmem:[#allocation5 + $0x74] sm:$0xf]
        %v274 = vld [vmem:[#allocation5 + $0x78] sm:$0xf]
        %v275 = vld [vmem:[#allocation5 + $0x7c] sm:$0xf]
        %v292 = vunpack.c.l.b16 %v228
        %v293 = vunpack.c.h.b16 %v228
        %v294 = vunpack.c.l.b16 %v229
        %v295 = vunpack.c.h.b16 %v229
        %v296 = vunpack.c.l.b16 %v230
        %v297 = vunpack.c.h.b16 %v230
        %v298 = vunpack.c.l.b16 %v231
        %v299 = vunpack.c.h.b16 %v231
        %v300 = vunpack.c.l.b16 %v232
        %v301 = vunpack.c.h.b16 %v232
        %v302 = vunpack.c.l.b16 %v233
        %v303 = vunpack.c.h.b16 %v233
        %v304 = vunpack.c.l.b16 %v234
        %v305 = vunpack.c.h.b16 %v234
        %v306 = vunpack.c.l.b16 %v235
        %v307 = vunpack.c.h.b16 %v235
        %v308 = vunpack.c.l.b16 %v236
        %v309 = vunpack.c.h.b16 %v236
        %v310 = vunpack.c.l.b16 %v237
        %v311 = vunpack.c.h.b16 %v237
        %v312 = vunpack.c.l.b16 %v238
        %v313 = vunpack.c.h.b16 %v238
        %v314 = vunpack.c.l.b16 %v239
        %v315 = vunpack.c.h.b16 %v239
        %v316 = vunpack.c.l.b16 %v240
        %v317 = vunpack.c.h.b16 %v240
        %v318 = vunpack.c.l.b16 %v241
        %v319 = vunpack.c.h.b16 %v241
        %v320 = vunpack.c.l.b16 %v242
        %v321 = vunpack.c.h.b16 %v242
        %v322 = vunpack.c.l.b16 %v243
        %v323 = vunpack.c.h.b16 %v243
        %v324 = vpack.c.b16 %v294, %v292
        %v325 = vpack.c.b16 %v295, %v293
        %v326 = vpack.c.b16 %v298, %v296
        %v327 = vpack.c.b16 %v299, %v297
        %v328 = vpack.c.b16 %v302, %v300
        %v329 = vpack.c.b16 %v303, %v301
        %v330 = vpack.c.b16 %v306, %v304
        %v331 = vpack.c.b16 %v307, %v305
        %v332 = vpack.c.b16 %v310, %v308
        %v333 = vpack.c.b16 %v311, %v309
        %v334 = vpack.c.b16 %v314, %v312
        %v335 = vpack.c.b16 %v315, %v313
        %v336 = vpack.c.b16 %v318, %v316
        %v337 = vpack.c.b16 %v319, %v317
        %v338 = vpack.c.b16 %v322, %v320
        %v339 = vpack.c.b16 %v323, %v321
        %v388 = vunpack.c.l.b16 %v244
        %v389 = vunpack.c.l.b16 %v245
        %v390 = vunpack.c.l.b16 %v246
        %v391 = vunpack.c.l.b16 %v247
        %v392 = vunpack.c.l.b16 %v248
        %v393 = vunpack.c.l.b16 %v249
        %v394 = vunpack.c.l.b16 %v250
        %v395 = vunpack.c.l.b16 %v251
        %v396 = vunpack.c.l.b16 %v252
        %v397 = vunpack.c.l.b16 %v253
        %v398 = vunpack.c.l.b16 %v254
        %v399 = vunpack.c.l.b16 %v255
        %v400 = vunpack.c.l.b16 %v256
        %v401 = vunpack.c.l.b16 %v257
        %v402 = vunpack.c.l.b16 %v258
        %v403 = vunpack.c.l.b16 %v259
        %v404 = vunpack.c.l.b16 %v260
        %v405 = vunpack.c.l.b16 %v261
        %v406 = vunpack.c.l.b16 %v262
        %v407 = vunpack.c.l.b16 %v263
        %v408 = vunpack.c.l.b16 %v264
        %v409 = vunpack.c.l.b16 %v265
        %v410 = vunpack.c.l.b16 %v266
        %v411 = vunpack.c.l.b16 %v267
        %v412 = vunpack.c.l.b16 %v268
        %v413 = vunpack.c.l.b16 %v269
        %v414 = vunpack.c.l.b16 %v270
        %v415 = vunpack.c.l.b16 %v271
        %v416 = vunpack.c.l.b16 %v272
        %v417 = vunpack.c.l.b16 %v273
        %v418 = vunpack.c.l.b16 %v274
        %v419 = vunpack.c.l.b16 %v275
        %v420 = vpack.c.b16 %v389, %v388
        %v421 = vpack.c.b16 %v391, %v390
        %v422 = vpack.c.b16 %v393, %v392
        %v423 = vpack.c.b16 %v395, %v394
        %v424 = vpack.c.b16 %v397, %v396
        %v425 = vpack.c.b16 %v399, %v398
        %v426 = vpack.c.b16 %v401, %v400
        %v427 = vpack.c.b16 %v403, %v402
        %v428 = vpack.c.b16 %v405, %v404
        %v429 = vpack.c.b16 %v407, %v406
        %v430 = vpack.c.b16 %v409, %v408
        %v431 = vpack.c.b16 %v411, %v410
        %v432 = vpack.c.b16 %v413, %v412
        %v433 = vpack.c.b16 %v415, %v414
        %v434 = vpack.c.b16 %v417, %v416
        %v435 = vpack.c.b16 %v419, %v418
        %452 = vmatpush.bf16.msra.mxu0 %v427
        %453 = vmatpush.bf16.msra.mxu0 %v426
        %454 = vmatpush.bf16.msra.mxu0 %v425
        %455 = vmatpush.bf16.msra.mxu0 %v424
        %456 = vmatpush.bf16.msra.mxu0 %v423
        %457 = vmatpush.bf16.msra.mxu0 %v422
        %458 = vmatpush.bf16.msra.mxu0 %v421
        %459 = vmatpush.bf16.msra.mxu0 %v420
        %460 = vmatmul.bf16.gmra.mxu0 %v324
        %v461 = vpop.f32.mrf.mxu0
        %v462 = vadd.f32 0.0, %v461
        %v463 = vpop.f32.mrf.mxu0
        %v464 = vadd.f32 0.0, %v463
        %465 = vmatmul.bf16.gmra.mxu0 %v326
        %v466 = vpop.f32.mrf.mxu0
        %v467 = vadd.f32 0.0, %v466
        %v468 = vpop.f32.mrf.mxu0
        %v469 = vadd.f32 0.0, %v468
        %470 = vmatmul.bf16.gmra.mxu0 %v328
        %v471 = vpop.f32.mrf.mxu0
        %v472 = vadd.f32 0.0, %v471
        %v473 = vpop.f32.mrf.mxu0
        %v474 = vadd.f32 0.0, %v473
        %475 = vmatmul.bf16.gmra.mxu0 %v330
        %v476 = vpop.f32.mrf.mxu0
        %v477 = vadd.f32 0.0, %v476
        %v478 = vpop.f32.mrf.mxu0
        %v479 = vadd.f32 0.0, %v478
        %480 = vmatmul.bf16.gmra.mxu0 %v332
        %v481 = vpop.f32.mrf.mxu0
        %v482 = vadd.f32 0.0, %v481
        %v483 = vpop.f32.mrf.mxu0
        %v484 = vadd.f32 0.0, %v483
        %485 = vmatmul.bf16.gmra.mxu0 %v334
        %v486 = vpop.f32.mrf.mxu0
        %v487 = vadd.f32 0.0, %v486
        %v488 = vpop.f32.mrf.mxu0
        %v489 = vadd.f32 0.0, %v488
        %490 = vmatmul.bf16.gmra.mxu0 %v336
        %v491 = vpop.f32.mrf.mxu0
        %v492 = vadd.f32 0.0, %v491
        %v493 = vpop.f32.mrf.mxu0
        %v494 = vadd.f32 0.0, %v493
        %495 = vmatmul.bf16.gmra.mxu0 %v338
        %v496 = vpop.f32.mrf.mxu0
        %v497 = vadd.f32 0.0, %v496
        %v498 = vpop.f32.mrf.mxu0
        %v499 = vadd.f32 0.0, %v498
        %500 = vdwg.mxu0
        %501 = vmatpush.bf16.msra.mxu0 %v435
        %502 = vmatpush.bf16.msra.mxu0 %v434
        %503 = vmatpush.bf16.msra.mxu0 %v433
        %504 = vmatpush.bf16.msra.mxu0 %v432
        %505 = vmatpush.bf16.msra.mxu0 %v431
        %506 = vmatpush.bf16.msra.mxu0 %v430
        %507 = vmatpush.bf16.msra.mxu0 %v429
        %508 = vmatpush.bf16.msra.mxu0 %v428
        %509 = vmatmul.bf16.gmra.mxu0 %v325
        %v510 = vpop.f32.mrf.mxu0
        %v511 = vadd.f32 %v462, %v510
        %v512 = vpop.f32.mrf.mxu0
        %v513 = vadd.f32 %v464, %v512
        %514 = vmatmul.bf16.gmra.mxu0 %v327
        %v515 = vpop.f32.mrf.mxu0
        %v516 = vadd.f32 %v467, %v515
        %v517 = vpop.f32.mrf.mxu0
        %v518 = vadd.f32 %v469, %v517
        %519 = vmatmul.bf16.gmra.mxu0 %v329
        %v520 = vpop.f32.mrf.mxu0
        %v521 = vadd.f32 %v472, %v520
        %v522 = vpop.f32.mrf.mxu0
        %v523 = vadd.f32 %v474, %v522
        %524 = vmatmul.bf16.gmra.mxu0 %v331
        %v525 = vpop.f32.mrf.mxu0
        %v526 = vadd.f32 %v477, %v525
        %v527 = vpop.f32.mrf.mxu0
        %v528 = vadd.f32 %v479, %v527
        %529 = vmatmul.bf16.gmra.mxu0 %v333
        %v530 = vpop.f32.mrf.mxu0
        %v531 = vadd.f32 %v482, %v530
        %v532 = vpop.f32.mrf.mxu0
        %v533 = vadd.f32 %v484, %v532
        %534 = vmatmul.bf16.gmra.mxu0 %v335
        %v535 = vpop.f32.mrf.mxu0
        %v536 = vadd.f32 %v487, %v535
        %v537 = vpop.f32.mrf.mxu0
        %v538 = vadd.f32 %v489, %v537
        %539 = vmatmul.bf16.gmra.mxu0 %v337
        %v540 = vpop.f32.mrf.mxu0
        %v541 = vadd.f32 %v492, %v540
        %v542 = vpop.f32.mrf.mxu0
        %v543 = vadd.f32 %v494, %v542
        %544 = vmatmul.bf16.gmra.mxu0 %v339
        %v545 = vpop.f32.mrf.mxu0
        %v546 = vadd.f32 %v497, %v545
        %v547 = vpop.f32.mrf.mxu0
        %v548 = vadd.f32 %v499, %v547
        %549 = vdwg.mxu0
        %s550 = sshra.s32 %s227, 3
        %s551 = sand.u32 %s227, 7
        %s552 = smul.addr %s550, 4
        %s553 = scalar_lea.vmem [#allocation5], %s552
        %v554 = vld [vmem:[%s553] sm:$0xf]
        %v555 = vld [vmem:[%s553 + $0x4] sm:$0xf]
        %v556 = vld [vmem:[%s553 + $0x8] sm:$0xf]
        %v557 = vld [vmem:[%s553 + $0xc] sm:$0xf]
        %v558 = vld [vmem:[%s553 + $0x10] sm:$0xf]
        %v559 = vld [vmem:[%s553 + $0x14] sm:$0xf]
        %v560 = vld [vmem:[%s553 + $0x18] sm:$0xf]
        %v561 = vld [vmem:[%s553 + $0x1c] sm:$0xf]
        %v562 = vld [vmem:[%s553 + $0x20] sm:$0xf]
        %v563 = vld [vmem:[%s553 + $0x24] sm:$0xf]
        %v564 = vld [vmem:[%s553 + $0x28] sm:$0xf]
        %v565 = vld [vmem:[%s553 + $0x2c] sm:$0xf]
        %v566 = vld [vmem:[%s553 + $0x30] sm:$0xf]
        %v567 = vld [vmem:[%s553 + $0x34] sm:$0xf]
        %v568 = vld [vmem:[%s553 + $0x38] sm:$0xf]
        %v569 = vld [vmem:[%s553 + $0x3c] sm:$0xf]
        %v570 = vld [vmem:[#allocation7] sm:$0xf]
        %v571 = vld [vmem:[#allocation7 + $0x4] sm:$0xf]
        %v572 = vld [vmem:[#allocation7 + $0x8] sm:$0xf]
        %v573 = vld [vmem:[#allocation7 + $0xc] sm:$0xf]
        %v574 = vld [vmem:[#allocation7 + $0x10] sm:$0xf]
        %v575 = vld [vmem:[#allocation7 + $0x14] sm:$0xf]
        %v576 = vld [vmem:[#allocation7 + $0x18] sm:$0xf]
        %v577 = vld [vmem:[#allocation7 + $0x1c] sm:$0xf]
        %v578 = vld [vmem:[#allocation7 + $0x20] sm:$0xf]
        %v579 = vld [vmem:[#allocation7 + $0x24] sm:$0xf]
        %v580 = vld [vmem:[#allocation7 + $0x28] sm:$0xf]
        %v581 = vld [vmem:[#allocation7 + $0x2c] sm:$0xf]
        %v582 = vld [vmem:[#allocation7 + $0x30] sm:$0xf]
        %v583 = vld [vmem:[#allocation7 + $0x34] sm:$0xf]
        %v584 = vld [vmem:[#allocation7 + $0x38] sm:$0xf]
        %v585 = vld [vmem:[#allocation7 + $0x3c] sm:$0xf]
        %v586 = vpack.c.bf16 %v513, %v511
        %v587 = vpack.c.bf16 %v518, %v516
        %v588 = vpack.c.bf16 %v523, %v521
        %v589 = vpack.c.bf16 %v528, %v526
        %v590 = vpack.c.bf16 %v533, %v531
        %v591 = vpack.c.bf16 %v538, %v536
        %v592 = vpack.c.bf16 %v543, %v541
        %v593 = vpack.c.bf16 %v548, %v546
        %v594 = vld [vmem:[#allocation7 + $0x40] sm:$0xf]
        %v595 = vld [vmem:[#allocation7 + $0x44] sm:$0xf]
        %v596 = vld [vmem:[#allocation7 + $0x48] sm:$0xf]
        %v597 = vld [vmem:[#allocation7 + $0x4c] sm:$0xf]
        %v598 = vld [vmem:[#allocation7 + $0x50] sm:$0xf]
        %v599 = vld [vmem:[#allocation7 + $0x54] sm:$0xf]
        %v600 = vld [vmem:[#allocation7 + $0x58] sm:$0xf]
        %v601 = vld [vmem:[#allocation7 + $0x5c] sm:$0xf]
        %v602 = vld [vmem:[#allocation7 + $0x60] sm:$0xf]
        %v603 = vld [vmem:[#allocation7 + $0x64] sm:$0xf]
        %v604 = vld [vmem:[#allocation7 + $0x68] sm:$0xf]
        %v605 = vld [vmem:[#allocation7 + $0x6c] sm:$0xf]
        %v606 = vld [vmem:[#allocation7 + $0x70] sm:$0xf]
        %v607 = vld [vmem:[#allocation7 + $0x74] sm:$0xf]
        %v608 = vld [vmem:[#allocation7 + $0x78] sm:$0xf]
        %v609 = vld [vmem:[#allocation7 + $0x7c] sm:$0xf]
        %v626 = vunpack.c.l.b16 %v594
        %v627 = vunpack.c.l.b16 %v595
        %v628 = vunpack.c.l.b16 %v596
        %v629 = vunpack.c.l.b16 %v597
        %v630 = vunpack.c.l.b16 %v598
        %v631 = vunpack.c.l.b16 %v599
        %v632 = vunpack.c.l.b16 %v600
        %v633 = vunpack.c.l.b16 %v601
        %v634 = vunpack.c.l.b16 %v602
        %v635 = vunpack.c.l.b16 %v603
        %v636 = vunpack.c.l.b16 %v604
        %v637 = vunpack.c.l.b16 %v605
        %v638 = vunpack.c.l.b16 %v606
        %v639 = vunpack.c.l.b16 %v607
        %v640 = vunpack.c.l.b16 %v608
        %v641 = vunpack.c.l.b16 %v609
        %v642 = vpack.c.b16 %v627, %v626
        %v643 = vpack.c.b16 %v629, %v628
        %v644 = vpack.c.b16 %v631, %v630
        %v645 = vpack.c.b16 %v633, %v632
        %v646 = vpack.c.b16 %v635, %v634
        %v647 = vpack.c.b16 %v637, %v636
        %v648 = vpack.c.b16 %v639, %v638
        %v649 = vpack.c.b16 %v641, %v640
        %658 = vmatpush.bf16.msra.mxu0 %v649
        %659 = vmatpush.bf16.msra.mxu0 %v648
        %660 = vmatpush.bf16.msra.mxu0 %v647
        %661 = vmatpush.bf16.msra.mxu0 %v646
        %662 = vmatpush.bf16.msra.mxu0 %v645
        %663 = vmatpush.bf16.msra.mxu0 %v644
        %664 = vmatpush.bf16.msra.mxu0 %v643
        %665 = vmatpush.bf16.msra.mxu0 %v642
        %666 = vmatmul.bf16.gmra.mxu0 %v586
        %v667 = vpop.f32.mrf.mxu0
        %v668 = vadd.f32 0.0, %v667
        %v669 = vpop.f32.mrf.mxu0
        %v670 = vadd.f32 0.0, %v669
        %671 = vmatmul.bf16.gmra.mxu0 %v587
        %v672 = vpop.f32.mrf.mxu0
        %v673 = vadd.f32 0.0, %v672
        %v674 = vpop.f32.mrf.mxu0
        %v675 = vadd.f32 0.0, %v674
        %676 = vmatmul.bf16.gmra.mxu0 %v588
        %v677 = vpop.f32.mrf.mxu0
        %v678 = vadd.f32 0.0, %v677
        %v679 = vpop.f32.mrf.mxu0
        %v680 = vadd.f32 0.0, %v679
        %681 = vmatmul.bf16.gmra.mxu0 %v589
        %v682 = vpop.f32.mrf.mxu0
        %v683 = vadd.f32 0.0, %v682
        %v684 = vpop.f32.mrf.mxu0
        %v685 = vadd.f32 0.0, %v684
        %686 = vmatmul.bf16.gmra.mxu0 %v590
        %v687 = vpop.f32.mrf.mxu0
        %v688 = vadd.f32 0.0, %v687
        %v689 = vpop.f32.mrf.mxu0
        %v690 = vadd.f32 0.0, %v689
        %691 = vmatmul.bf16.gmra.mxu0 %v591
        %v692 = vpop.f32.mrf.mxu0
        %v693 = vadd.f32 0.0, %v692
        %v694 = vpop.f32.mrf.mxu0
        %v695 = vadd.f32 0.0, %v694
        %696 = vmatmul.bf16.gmra.mxu0 %v592
        %v697 = vpop.f32.mrf.mxu0
        %v698 = vadd.f32 0.0, %v697
        %v699 = vpop.f32.mrf.mxu0
        %v700 = vadd.f32 0.0, %v699
        %701 = vmatmul.bf16.gmra.mxu0 %v593
        %v702 = vpop.f32.mrf.mxu0
        %v703 = vadd.f32 0.0, %v702
        %v704 = vpop.f32.mrf.mxu0
        %v705 = vadd.f32 0.0, %v704
        %706 = vdwg.mxu0
        %v723 = vunpack.c.l.b16 %v554
        %v724 = vunpack.c.l.b16 %v555
        %v725 = vunpack.c.l.b16 %v556
        %v726 = vunpack.c.l.b16 %v557
        %v727 = vunpack.c.l.b16 %v558
        %v728 = vunpack.c.l.b16 %v559
        %v729 = vunpack.c.l.b16 %v560
        %v730 = vunpack.c.l.b16 %v561
        %v731 = vunpack.c.l.b16 %v562
        %v732 = vunpack.c.l.b16 %v563
        %v733 = vunpack.c.l.b16 %v564
        %v734 = vunpack.c.l.b16 %v565
        %v735 = vunpack.c.l.b16 %v566
        %v736 = vunpack.c.l.b16 %v567
        %v737 = vunpack.c.l.b16 %v568
        %v738 = vunpack.c.l.b16 %v569
        %v739 = vpack.c.b16 %v724, %v723
        %v740 = vpack.c.b16 %v726, %v725
        %v741 = vpack.c.b16 %v728, %v727
        %v742 = vpack.c.b16 %v730, %v729
        %v743 = vpack.c.b16 %v732, %v731
        %v744 = vpack.c.b16 %v734, %v733
        %v745 = vpack.c.b16 %v736, %v735
        %v746 = vpack.c.b16 %v738, %v737
        %v771 = vunpack.c.l.b16 %v570
        %v772 = vunpack.c.l.b16 %v571
        %v773 = vunpack.c.l.b16 %v572
        %v774 = vunpack.c.l.b16 %v573
        %v775 = vunpack.c.l.b16 %v574
        %v776 = vunpack.c.l.b16 %v575
        %v777 = vunpack.c.l.b16 %v576
        %v778 = vunpack.c.l.b16 %v577
        %v779 = vunpack.c.l.b16 %v578
        %v780 = vunpack.c.l.b16 %v579
        %v781 = vunpack.c.l.b16 %v580
        %v782 = vunpack.c.l.b16 %v581
        %v783 = vunpack.c.l.b16 %v582
        %v784 = vunpack.c.l.b16 %v583
        %v785 = vunpack.c.l.b16 %v584
        %v786 = vunpack.c.l.b16 %v585
        %v787 = vpack.c.b16 %v772, %v771
        %v788 = vpack.c.b16 %v774, %v773
        %v789 = vpack.c.b16 %v776, %v775
        %v790 = vpack.c.b16 %v778, %v777
        %v791 = vpack.c.b16 %v780, %v779
        %v792 = vpack.c.b16 %v782, %v781
        %v793 = vpack.c.b16 %v784, %v783
        %v794 = vpack.c.b16 %v786, %v785
        %803 = vmatpush.bf16.msra.mxu0 %v794
        %804 = vmatpush.bf16.msra.mxu0 %v793
        %805 = vmatpush.bf16.msra.mxu0 %v792
        %806 = vmatpush.bf16.msra.mxu0 %v791
        %807 = vmatpush.bf16.msra.mxu0 %v790
        %808 = vmatpush.bf16.msra.mxu0 %v789
        %809 = vmatpush.bf16.msra.mxu0 %v788
        %810 = vmatpush.bf16.msra.mxu0 %v787
        %811 = vmatmul.bf16.gmra.mxu0 %v739
        %v812 = vpop.f32.mrf.mxu0
        %v813 = vadd.f32 %v668, %v812
        %v814 = vpop.f32.mrf.mxu0
        %v815 = vadd.f32 %v670, %v814
        %816 = vmatmul.bf16.gmra.mxu0 %v740
        %v817 = vpop.f32.mrf.mxu0
        %v818 = vadd.f32 %v673, %v817
        %v819 = vpop.f32.mrf.mxu0
        %v820 = vadd.f32 %v675, %v819
        %821 = vmatmul.bf16.gmra.mxu0 %v741
        %v822 = vpop.f32.mrf.mxu0
        %v823 = vadd.f32 %v678, %v822
        %v824 = vpop.f32.mrf.mxu0
        %v825 = vadd.f32 %v680, %v824
        %826 = vmatmul.bf16.gmra.mxu0 %v742
        %v827 = vpop.f32.mrf.mxu0
        %v828 = vadd.f32 %v683, %v827
        %v829 = vpop.f32.mrf.mxu0
        %v830 = vadd.f32 %v685, %v829
        %831 = vmatmul.bf16.gmra.mxu0 %v743
        %v832 = vpop.f32.mrf.mxu0
        %v833 = vadd.f32 %v688, %v832
        %v834 = vpop.f32.mrf.mxu0
        %v835 = vadd.f32 %v690, %v834
        %836 = vmatmul.bf16.gmra.mxu0 %v744
        %v837 = vpop.f32.mrf.mxu0
        %v838 = vadd.f32 %v693, %v837
        %v839 = vpop.f32.mrf.mxu0
        %v840 = vadd.f32 %v695, %v839
        %841 = vmatmul.bf16.gmra.mxu0 %v745
        %v842 = vpop.f32.mrf.mxu0
        %v843 = vadd.f32 %v698, %v842
        %v844 = vpop.f32.mrf.mxu0
        %v845 = vadd.f32 %v700, %v844
        %846 = vmatmul.bf16.gmra.mxu0 %v746
        %v847 = vpop.f32.mrf.mxu0
        %v848 = vadd.f32 %v703, %v847
        %v849 = vpop.f32.mrf.mxu0
        %v850 = vadd.f32 %v705, %v849
        %851 = vdwg.mxu0
        %v852 = vmax.f32 %v813, 0.0
        %v853 = vmax.f32 %v815, 0.0
        %v854 = vmax.f32 %v818, 0.0
        %v855 = vmax.f32 %v820, 0.0
        %v856 = vmax.f32 %v823, 0.0
        %v857 = vmax.f32 %v825, 0.0
        %v858 = vmax.f32 %v828, 0.0
        %v859 = vmax.f32 %v830, 0.0
        %v860 = vmax.f32 %v833, 0.0
        %v861 = vmax.f32 %v835, 0.0
        %v862 = vmax.f32 %v838, 0.0
        %v863 = vmax.f32 %v840, 0.0
        %v864 = vmax.f32 %v843, 0.0
        %v865 = vmax.f32 %v845, 0.0
        %v866 = vmax.f32 %v848, 0.0
        %v867 = vmax.f32 %v850, 0.0
        %v868 = vpack.c.bf16 %v852, %v852
        %v869 = vpack.c.bf16 %v853, %v853
        %v870 = vpack.c.bf16 %v854, %v854
        %v871 = vpack.c.bf16 %v855, %v855
        %v872 = vpack.c.bf16 %v856, %v856
        %v873 = vpack.c.bf16 %v857, %v857
        %v874 = vpack.c.bf16 %v858, %v858
        %v875 = vpack.c.bf16 %v859, %v859
        %v876 = vpack.c.bf16 %v860, %v860
        %v877 = vpack.c.bf16 %v861, %v861
        %v878 = vpack.c.bf16 %v862, %v862
        %v879 = vpack.c.bf16 %v863, %v863
        %v880 = vpack.c.bf16 %v864, %v864
        %v881 = vpack.c.bf16 %v865, %v865
        %v882 = vpack.c.bf16 %v866, %v866
        %v883 = vpack.c.bf16 %v867, %v867
        %884 = vst [vmem:[%s224] sm:$0xf] %v868
        %885 = vst [vmem:[%s224 + $0x4] sm:$0xf] %v869
        %886 = vst [vmem:[%s224 + $0x8] sm:$0xf] %v870
        %887 = vst [vmem:[%s224 + $0xc] sm:$0xf] %v871
        %888 = vst [vmem:[%s224 + $0x10] sm:$0xf] %v872
        %889 = vst [vmem:[%s224 + $0x14] sm:$0xf] %v873
        %890 = vst [vmem:[%s224 + $0x18] sm:$0xf] %v874
        %891 = vst [vmem:[%s224 + $0x1c] sm:$0xf] %v875
        %892 = vst [vmem:[%s224 + $0x20] sm:$0xf] %v876
        %893 = vst [vmem:[%s224 + $0x24] sm:$0xf] %v877
        %894 = vst [vmem:[%s224 + $0x28] sm:$0xf] %v878
        %895 = vst [vmem:[%s224 + $0x2c] sm:$0xf] %v879
        %896 = vst [vmem:[%s224 + $0x30] sm:$0xf] %v880
        %897 = vst [vmem:[%s224 + $0x34] sm:$0xf] %v881
        %898 = vst [vmem:[%s224 + $0x38] sm:$0xf] %v882
        %899 = vst [vmem:[%s224 + $0x3c] sm:$0xf] %v883
        %s900 = sand.u32 %s97, 1
        %s901 = scalar_lea.sflag [#allocation4], %s900
        %s902 = sand.u32 %s97, 1
        %s903 = smul.addr %s902, 64
        %s904 = scalar_lea.vmem [#allocation8], %s903
        // Predicated region
        $region45: #{tpu_custom_call.1} parent=31 // pred_check
          %p905 = pneg %p107
        $region46: #{tpu_custom_call.1} parent=31 // pred_check_branch
          %907 = sbr.rel (%p905) target = $region48
        $region47: #{tpu_custom_call.1} parent=31 // pred_region
          %s908 = smul.u32 16, %s21
          %910 = vsyncadd %s901, 0
          %s911 = smul.addr %s908, 4
          %s912 = scalar_lea.hbm %s3, %s911
          %s913 = sshll.u32 %s904, 4
          %s914 = int_to_ptr.vmem [resolvable:$true] %s913
          %s915 = sshll.u32 %s912, 4
          %s916 = int_to_ptr.hbm [resolvable:$true] %s915
          %921 = dma.vmem_to_hbm [thread:$0]  %s914, 1024, %s916, %s901, 64, 64, 4
        $region48: #{tpu_custom_call.1} parent=31 // pred_fallthru
          _
      $region32: #{tpu_custom_call.1} parent=5 // pred_fallthru
        _
      %p922 = scmp.le.s32.totalorder 2, %s16
      // Predicated region
      $region49: #{tpu_custom_call.1} parent=5 // pred_check
        %p923 = pneg %p922
      $region50: #{tpu_custom_call.1} parent=5 // pred_check_branch
        %925 = sbr.rel (%p923) target = $region52
      $region51: #{tpu_custom_call.1} parent=5 // pred_region
        %s926 = ssub.s32 %s16, 2
        // Predicated region
        $region53: #{tpu_custom_call.1} parent=51 // pred_check
          %p927 = pneg %p113
        $region54: #{tpu_custom_call.1} parent=51 // pred_check_branch
          %929 = sbr.rel (%p927) target = $region56
        $region55: #{tpu_custom_call.1} parent=51 // pred_region
          %s930 = sand.u32 %s98, 1
          %s931 = scalar_lea.sflag [#allocation4], %s930
          %s932 = sand.u32 %s98, 1
          %s933 = smul.addr %s932, 64
          %s934 = scalar_lea.vmem [#allocation8], %s933
          %936 = dma.done %s931, 1024
        $region56: #{tpu_custom_call.1} parent=51 // pred_fallthru
          _
      $region52: #{tpu_custom_call.1} parent=5 // pred_fallthru
        _
    $region6: #{tpu_custom_call.1} parent=1 // loop_footer
      %s20 = sadd.s32 1, %s16
    $region7: #{tpu_custom_call.1} parent=1 // loop_footer_branch
      %15 = sbr.rel target = $region3
    $region8: #{tpu_custom_call.1} parent=1 // loop_exit
      _
    %937 = vsyncpa [#allocation3], 1
    %s938 = scalar_lea.sflag [#allocation3], 1
    %939 = vsyncpa %s938, 1
    %940 = vsyncpa [#allocation6], 1
    %941 = vsyncpa [#allocation4], 1
    %s942 = scalar_lea.sflag [#allocation4], 1
    %943 = vsyncpa %s942, 1

// kernel: tpu_custom_call.1
$region0: #{tpu_custom_call.1}
  #allocation0 [shape = 'u32[]', space=smem, size = 0x4, offset = 0x4, fixed_abs, tag = 'smem constant byte address 0x4 - core index']
  #allocation1 [shape = 'u32[72,128]{1,0:T(1,128)}', space=vmem, size = 0x9000, scoped, tag = 'internal scratch']
  %s0 = inlined_call_operand.hbm [shape: bf16[256,256], index: 0, kind: input, shape index: {}]
  %s1 = inlined_call_operand.hbm [shape: bf16[256,128], index: 1, kind: input, shape index: {}]
  %s2 = inlined_call_operand.hbm [shape: bf16[256,128], index: 2, kind: input, shape index: {}]
  %s3 = inlined_call_operand.hbm [shape: bf16[256,128], index: 3, kind: output, shape index: {}]
  %s4 = sld [smem:[#allocation0]]
  $region57: #{tpu_custom_call.1} parent=0
    _
  %s6 = ssub.s32 1, %s4
  %s7 = scalar_select 0, %s6, %s4
  $region1: #{tpu_custom_call.1} parent=0
    #allocation2 [shape = 'u8[131072]{0}', space=vmem, size = 0x20000, scoped, tag = 'input window, operand 0']
    #allocation3 [shape = 's32[2]{0}', space=sflag, size = 0x8, scoped, tag = 'scoped memory for tpu_custom_call.1']
    #allocation4 [shape = 's32[2]{0}', space=sflag, size = 0x8, scoped, tag = 'scoped memory for tpu_custom_call.1']
    #allocation5 [shape = 'u8[65536]{0}', space=vmem, size = 0x10000, scoped, tag = 'input window, operand 1, single buffered']
    #allocation6 [shape = 's32[1]{0}', space=sflag, size = 0x4, scoped, tag = 'scoped memory for tpu_custom_call.1']
    #allocation7 [shape = 'u8[65536]{0}', space=vmem, size = 0x10000, scoped, tag = 'input window, operand 2, single buffered']
    #allocation8 [shape = 'u8[65536]{0}', space=vmem, size = 0x10000, scoped, tag = 'output window, operand 0']
    %8 = vsyncpa [#allocation3], 0
    %s9 = scalar_lea.sflag [#allocation3], 1
    %10 = vsyncpa %s9, 0
    %11 = vsyncpa [#allocation6], 0
    %12 = vsyncpa [#allocation4], 0
    %s13 = scalar_lea.sflag [#allocation4], 1
    %14 = vsyncpa %s13, 0
    loop: start=0, step=1, limit=4
    $region2: #{tpu_custom_call.1} parent=1 // loop_pre_header
      _
    $region3: #{tpu_custom_call.1} parent=1 // loop_header
      %s16 = sphi 0, %s20
      %p17 = scmp.ge.s32.totalorder %s16, 4
      %s26 = sphi 0, %s28
      %s29 = sphi 0, %s26
      %s30 = sphi 0, %s29
      %s46 = sphi 0, %s30
      %s50 = sphi 0, %s50
      %s52 = sphi 0, %s50
      %s53 = sphi 0, %s52
      %s67 = sphi 0, %s53
      %s71 = sphi 0, %s71
      %s73 = sphi 0, %s71
      %s74 = sphi 0, %s73
      %s88 = sphi 0, %s74
      %s94 = sphi 0, %s96
      %s97 = sphi 0, %s94
      %s98 = sphi 0, %s97
      %s114 = sphi 0, %s98
    $region4: #{tpu_custom_call.1} parent=1 // loop_header_branch
      %19 = sbr.rel (%p17) target = $region8
    $region5: #{tpu_custom_call.1} parent=1 // loop_body
      %s21 = ssub.s32 %s16, 1
      %s22 = ssub.s32 %s16, 2
      %s23 = sadd.s32 %s16, 1
      %s24 = ssub.s32 %s16, %s23
      %p25 = scmp.eq.s32.totalorder %s24, 0
      %s27 = sadd.s32 %s26, 1
      %s28 = scalar_select %p25, %s26, %s27
      %p31 = pneg %p25
      %p32 = scmp.eq.s32.totalorder %s16, 1
      %p33 = por %p31, %p32
      %p34 = scmp.ne.s32.totalorder %s26, %s29
      %p35 = scmp.eq.s32.totalorder %s16, 0
      %p36 = por %p34, %p35
      %p37 = scmp.ne.s32.totalorder %s26, %s29
      %p38 = scmp.eq.s32.totalorder %s21, 1
      %p39 = por %p37, %p38
      %p40 = scmp.ne.s32.totalorder %s29, %s30
      %p41 = scmp.eq.s32.totalorder %s21, 0
      %p42 = por %p40, %p41
      %p43 = scmp.ne.s32.totalorder %s29, %s30
      %p44 = scmp.eq.s32.totalorder %s22, 1
      %p45 = por %p43, %p44
      %p47 = scmp.ne.s32.totalorder %s30, %s46
      %p48 = scmp.eq.s32.totalorder %s22, 0
      %p49 = por %p47, %p48
      %s51 = sadd.s32 %s50, 1
      %p54 = scmp.eq.s32.totalorder %s16, 1
      %p55 = scmp.ne.s32.totalorder %s50, %s52
      %p56 = scmp.eq.s32.totalorder %s16, 0
      %p57 = por %p55, %p56
      %p58 = scmp.ne.s32.totalorder %s50, %s52
      %p59 = scmp.eq.s32.totalorder %s21, 1
      %p60 = por %p58, %p59
      %p61 = scmp.ne.s32.totalorder %s52, %s53
      %p62 = scmp.eq.s32.totalorder %s21, 0
      %p63 = por %p61, %p62
      %p64 = scmp.ne.s32.totalorder %s52, %s53
      %p65 = scmp.eq.s32.totalorder %s22, 1
      %p66 = por %p64, %p65
      %p68 = scmp.ne.s32.totalorder %s53, %s67
      %p69 = scmp.eq.s32.totalorder %s22, 0
      %p70 = por %p68, %p69
      %s72 = sadd.s32 %s71, 1
      %p75 = scmp.eq.s32.totalorder %s16, 1
      %p76 = scmp.ne.s32.totalorder %s71, %s73
      %p77 = scmp.eq.s32.totalorder %s16, 0
      %p78 = por %p76, %p77
      %p79 = scmp.ne.s32.totalorder %s71, %s73
      %p80 = scmp.eq.s32.totalorder %s21, 1
      %p81 = por %p79, %p80
      %p82 = scmp.ne.s32.totalorder %s73, %s74
      %p83 = scmp.eq.s32.totalorder %s21, 0
      %p84 = por %p82, %p83
      %p85 = scmp.ne.s32.totalorder %s73, %s74
      %p86 = scmp.eq.s32.totalorder %s22, 1
      %p87 = por %p85, %p86
      %p89 = scmp.ne.s32.totalorder %s74, %s88
      %p90 = scmp.eq.s32.totalorder %s22, 0
      %p91 = por %p89, %p90
      %s92 = ssub.s32 %s16, %s23
      %p93 = scmp.eq.s32.totalorder %s92, 0
      %s95 = sadd.s32 %s94, 1
      %s96 = scalar_select %p93, %s94, %s95
      %p99 = pneg %p93
      %p100 = scmp.eq.s32.totalorder %s16, 1
      %p101 = por %p99, %p100
      %p102 = scmp.ne.s32.totalorder %s94, %s97
      %p103 = scmp.eq.s32.totalorder %s16, 0
      %p104 = por %p102, %p103
      %p105 = scmp.ne.s32.totalorder %s94, %s97
      %p106 = scmp.eq.s32.totalorder %s21, 1
      %p107 = por %p105, %p106
      %p108 = scmp.ne.s32.totalorder %s97, %s98
      %p109 = scmp.eq.s32.totalorder %s21, 0
      %p110 = por %p108, %p109
      %p111 = scmp.ne.s32.totalorder %s97, %s98
      %p112 = scmp.eq.s32.totalorder %s22, 1
      %p113 = por %p111, %p112
      %p115 = scmp.ne.s32.totalorder %s98, %s114
      %p116 = scmp.eq.s32.totalorder %s22, 0
      %p117 = por %p115, %p116
      %p118 = scmp.le.s32.totalorder 1, %s16
      %p119 = scmp.lt.s32.totalorder %s16, 3
      %p120 = pnand %p118, %p119
      %p121 = pneg %p120
      // Predicated region
      $region9: #{tpu_custom_call.1} parent=5 // pred_check
        _
      $region10: #{tpu_custom_call.1} parent=5 // pred_check_branch
        %123 = sbr.rel (%p120) target = $region12
      $region11: #{tpu_custom_call.1} parent=5 // pred_region
        %s124 = ssub.s32 %s16, 1
        // Predicated region
        $region13: #{tpu_custom_call.1} parent=11 // pred_check
          %p125 = pneg %p63
        $region14: #{tpu_custom_call.1} parent=11 // pred_check_branch
          %127 = sbr.rel (%p125) target = $region16
        $region15: #{tpu_custom_call.1} parent=11 // pred_region
          %129 = vsyncadd [#allocation6], 0
          %s130 = sshll.u32 %s1, 4
          %s131 = int_to_ptr.hbm [resolvable:$true] %s130
          %s132 = sshll.u32 [#allocation5], 4
          %s133 = int_to_ptr.vmem [resolvable:$true] %s132
          %138 = dma.hbm_to_vmem [thread:$0]  %s131, 2048, %s133, [#allocation6], 64, 64, 4
        $region16: #{tpu_custom_call.1} parent=11 // pred_fallthru
          _
        // Predicated region
        $region17: #{tpu_custom_call.1} parent=11 // pred_check
          %p139 = pneg %p84
        $region18: #{tpu_custom_call.1} parent=11 // pred_check_branch
          %141 = sbr.rel (%p139) target = $region20
        $region19: #{tpu_custom_call.1} parent=11 // pred_region
          %143 = vsyncadd [#allocation6], 0
          %s144 = sshll.u32 %s2, 4
          %s145 = int_to_ptr.hbm [resolvable:$true] %s144
          %s146 = sshll.u32 [#allocation7], 4
          %s147 = int_to_ptr.vmem [resolvable:$true] %s146
          %152 = dma.hbm_to_vmem [thread:$0]  %s145, 2048, %s147, [#allocation6], 64, 64, 4
        $region20: #{tpu_custom_call.1} parent=11 // pred_fallthru
          _
      $region12: #{tpu_custom_call.1} parent=5 // pred_fallthru
        _
      %p153 = scmp.lt.s32.totalorder %s16, 2
      // Predicated region
      $region21: #{tpu_custom_call.1} parent=5 // pred_check
        %p154 = pneg %p153
      $region22: #{tpu_custom_call.1} parent=5 // pred_check_branch
        %156 = sbr.rel (%p154) target = $region24
      $region23: #{tpu_custom_call.1} parent=5 // pred_region
        // Predicated region
        $region25: #{tpu_custom_call.1} parent=23 // pred_check
          %p157 = pneg %p36
        $region26: #{tpu_custom_call.1} parent=23 // pred_check_branch
          %159 = sbr.rel (%p157) target = $region28
        $region27: #{tpu_custom_call.1} parent=23 // pred_region
          %s160 = sand.u32 %s26, 1
          %s161 = scalar_lea.sflag [#allocation3], %s160
          %s162 = sand.u32 %s26, 1
          %s163 = smul.addr %s162, 128
          %s164 = scalar_lea.vmem [#allocation2], %s163
          %s165 = smul.u32 16, %s16
          %167 = vsyncadd %s161, 0
          %s168 = smul.addr %s165, 2
          %s169 = smul.addr %s168, 4
          %s170 = scalar_lea.hbm %s0, %s169
          %s171 = sshll.u32 %s170, 4
          %s172 = int_to_ptr.hbm [resolvable:$true] %s171
          %s173 = sshll.u32 %s164, 4
          %s174 = int_to_ptr.vmem [resolvable:$true] %s173
          %179 = dma.hbm_to_vmem [thread:$0]  %s172, 2048, %s174, %s161, 128, 128, 8
        $region28: #{tpu_custom_call.1} parent=23 // pred_fallthru
          _
      $region24: #{tpu_custom_call.1} parent=5 // pred_fallthru
        _
      %p180 = scmp.le.s32.totalorder 1, %s16
      %p181 = scmp.lt.s32.totalorder %s16, 3
      %p182 = pnand %p180, %p181
      %p183 = pneg %p182
      // Predicated region
      $region29: #{tpu_custom_call.1} parent=5 // pred_check
        _
      $region30: #{tpu_custom_call.1} parent=5 // pred_check_branch
        %185 = sbr.rel (%p182) target = $region32
      $region31: #{tpu_custom_call.1} parent=5 // pred_region
        %s186 = ssub.s32 %s16, 1
        %s187 = sand.u32 %s29, 1
        %s188 = scalar_lea.sflag [#allocation3], %s187
        %s189 = sand.u32 %s29, 1
        %s190 = smul.addr %s189, 128
        %s191 = scalar_lea.vmem [#allocation2], %s190
        // Predicated region
        $region33: #{tpu_custom_call.1} parent=31 // pred_check
          %p192 = pneg %p42
        $region34: #{tpu_custom_call.1} parent=31 // pred_check_branch
          %194 = sbr.rel (%p192) target = $region36
        $region35: #{tpu_custom_call.1} parent=31 // pred_region
          %196 = dma.done %s188, 2048
        $region36: #{tpu_custom_call.1} parent=31 // pred_fallthru
          _
        // Predicated region
        $region37: #{tpu_custom_call.1} parent=31 // pred_check
          %p197 = pneg %p63
        $region38: #{tpu_custom_call.1} parent=31 // pred_check_branch
          %199 = sbr.rel (%p197) target = $region40
        $region39: #{tpu_custom_call.1} parent=31 // pred_region
          %201 = dma.done [#allocation6], 2048
        $region40: #{tpu_custom_call.1} parent=31 // pred_fallthru
          _
        // Predicated region
        $region41: #{tpu_custom_call.1} parent=31 // pred_check
          %p202 = pneg %p84
        $region42: #{tpu_custom_call.1} parent=31 // pred_check_branch
          %204 = sbr.rel (%p202) target = $region44
        $region43: #{tpu_custom_call.1} parent=31 // pred_region
          %206 = dma.done [#allocation6], 2048
        $region44: #{tpu_custom_call.1} parent=31 // pred_fallthru
          _
        %s207 = sand.u32 %s29, 1
        %s208 = scalar_lea.sflag [#allocation3], %s207
        %s209 = sand.u32 %s29, 1
        %s210 = smul.addr %s209, 128
        %s211 = scalar_lea.vmem [#allocation2], %s210
        %p212 = pneg %p42
        %p213 = pneg %p39
        %p214 = pneg %p63
        %p215 = pneg %p60
        %p216 = pneg %p84
        %p217 = pneg %p81
        %p218 = pneg %p110
        %p219 = pneg %p107
        %s220 = sand.u32 %s97, 1
        %s221 = scalar_lea.sflag [#allocation4], %s220
        %s222 = sand.u32 %s97, 1
        %s223 = smul.addr %s222, 64
        %s224 = scalar_lea.vmem [#allocation8], %s223
        %s225 = smul.u32 16, %s21
        %s226 = smul.u32 16, %s21
        %s227 = smul.u32 %s21, 128
        %v228 = vld [vmem:[%s191] sm:$0xff]
        %v229 = vld [vmem:[%s191 + $0x8] sm:$0xff]
        %v230 = vld [vmem:[%s191 + $0x10] sm:$0xff]
        %v231 = vld [vmem:[%s191 + $0x18] sm:$0xff]
        %v232 = vld [vmem:[%s191 + $0x20] sm:$0xff]
        %v233 = vld [vmem:[%s191 + $0x28] sm:$0xff]
        %v234 = vld [vmem:[%s191 + $0x30] sm:$0xff]
        %v235 = vld [vmem:[%s191 + $0x38] sm:$0xff]
        %v236 = vld [vmem:[%s191 + $0x40] sm:$0xff]
        %v237 = vld [vmem:[%s191 + $0x48] sm:$0xff]
        %v238 = vld [vmem:[%s191 + $0x50] sm:$0xff]
        %v239 = vld [vmem:[%s191 + $0x58] sm:$0xff]
        %v240 = vld [vmem:[%s191 + $0x60] sm:$0xff]
        %v241 = vld [vmem:[%s191 + $0x68] sm:$0xff]
        %v242 = vld [vmem:[%s191 + $0x70] sm:$0xff]
        %v243 = vld [vmem:[%s191 + $0x78] sm:$0xff]
        %v244 = vld [vmem:[#allocation5] sm:$0xf]
        %v245 = vld [vmem:[#allocation5 + $0x4] sm:$0xf]
        %v246 = vld [vmem:[#allocation5 + $0x8] sm:$0xf]
        %v247 = vld [vmem:[#allocation5 + $0xc] sm:$0xf]
        %v248 = vld [vmem:[#allocation5 + $0x10] sm:$0xf]
        %v249 = vld [vmem:[#allocation5 + $0x14] sm:$0xf]
        %v250 = vld [vmem:[#allocation5 + $0x18] sm:$0xf]
        %v251 = vld [vmem:[#allocation5 + $0x1c] sm:$0xf]
        %v252 = vld [vmem:[#allocation5 + $0x20] sm:$0xf]
        %v253 = vld [vmem:[#allocation5 + $0x24] sm:$0xf]
        %v254 = vld [vmem:[#allocation5 + $0x28] sm:$0xf]
        %v255 = vld [vmem:[#allocation5 + $0x2c] sm:$0xf]
        %v256 = vld [vmem:[#allocation5 + $0x30] sm:$0xf]
        %v257 = vld [vmem:[#allocation5 + $0x34] sm:$0xf]
        %v258 = vld [vmem:[#allocation5 + $0x38] sm:$0xf]
        %v259 = vld [vmem:[#allocation5 + $0x3c] sm:$0xf]
        %v260 = vld [vmem:[#allocation5 + $0x40] sm:$0xf]
        %v261 = vld [vmem:[#allocation5 + $0x44] sm:$0xf]
        %v262 = vld [vmem:[#allocation5 + $0x48] sm:$0xf]
        %v263 = vld [vmem:[#allocation5 + $0x4c] sm:$0xf]
        %v264 = vld [vmem:[#allocation5 + $0x50] sm:$0xf]
        %v265 = vld [vmem:[#allocation5 + $0x54] sm:$0xf]
        %v266 = vld [vmem:[#allocation5 + $0x58] sm:$0xf]
        %v267 = vld [vmem:[#allocation5 + $0x5c] sm:$0xf]
        %v268 = vld [vmem:[#allocation5 + $0x60] sm:$0xf]
        %v269 = vld [vmem:[#allocation5 + $0x64] sm:$0xf]
        %v270 = vld [vmem:[#allocation5 + $0x68] sm:$0xf]
        %v271 = vld [vmem:[#allocation5 + $0x6c] sm:$0xf]
        %v272 = vld [vmem:[#allocation5 + $0x70] sm:$0xf]
        %v273 = vld [vmem:[#allocation5 + $0x74] sm:$0xf]
        %v274 = vld [vmem:[#allocation5 + $0x78] sm:$0xf]
        %v275 = vld [vmem:[#allocation5 + $0x7c] sm:$0xf]
        %v292 = vunpack.c.l.b16 %v228
        %v293 = vunpack.c.h.b16 %v228
        %v294 = vunpack.c.l.b16 %v229
        %v295 = vunpack.c.h.b16 %v229
        %v296 = vunpack.c.l.b16 %v230
        %v297 = vunpack.c.h.b16 %v230
        %v298 = vunpack.c.l.b16 %v231
        %v299 = vunpack.c.h.b16 %v231
        %v300 = vunpack.c.l.b16 %v232
        %v301 = vunpack.c.h.b16 %v232
        %v302 = vunpack.c.l.b16 %v233
        %v303 = vunpack.c.h.b16 %v233
        %v304 = vunpack.c.l.b16 %v234
        %v305 = vunpack.c.h.b16 %v234
        %v306 = vunpack.c.l.b16 %v235
        %v307 = vunpack.c.h.b16 %v235
        %v308 = vunpack.c.l.b16 %v236
        %v309 = vunpack.c.h.b16 %v236
        %v310 = vunpack.c.l.b16 %v237
        %v311 = vunpack.c.h.b16 %v237
        %v312 = vunpack.c.l.b16 %v238
        %v313 = vunpack.c.h.b16 %v238
        %v314 = vunpack.c.l.b16 %v239
        %v315 = vunpack.c.h.b16 %v239
        %v316 = vunpack.c.l.b16 %v240
        %v317 = vunpack.c.h.b16 %v240
        %v318 = vunpack.c.l.b16 %v241
        %v319 = vunpack.c.h.b16 %v241
        %v320 = vunpack.c.l.b16 %v242
        %v321 = vunpack.c.h.b16 %v242
        %v322 = vunpack.c.l.b16 %v243
        %v323 = vunpack.c.h.b16 %v243
        %v324 = vpack.c.b16 %v294, %v292
        %v325 = vpack.c.b16 %v295, %v293
        %v326 = vpack.c.b16 %v298, %v296
        %v327 = vpack.c.b16 %v299, %v297
        %v328 = vpack.c.b16 %v302, %v300
        %v329 = vpack.c.b16 %v303, %v301
        %v330 = vpack.c.b16 %v306, %v304
        %v331 = vpack.c.b16 %v307, %v305
        %v332 = vpack.c.b16 %v310, %v308
        %v333 = vpack.c.b16 %v311, %v309
        %v334 = vpack.c.b16 %v314, %v312
        %v335 = vpack.c.b16 %v315, %v313
        %v336 = vpack.c.b16 %v318, %v316
        %v337 = vpack.c.b16 %v319, %v317
        %v338 = vpack.c.b16 %v322, %v320
        %v339 = vpack.c.b16 %v323, %v321
        %v388 = vunpack.c.l.b16 %v244
        %v389 = vunpack.c.l.b16 %v245
        %v390 = vunpack.c.l.b16 %v246
        %v391 = vunpack.c.l.b16 %v247
        %v392 = vunpack.c.l.b16 %v248
        %v393 = vunpack.c.l.b16 %v249
        %v394 = vunpack.c.l.b16 %v250
        %v395 = vunpack.c.l.b16 %v251
        %v396 = vunpack.c.l.b16 %v252
        %v397 = vunpack.c.l.b16 %v253
        %v398 = vunpack.c.l.b16 %v254
        %v399 = vunpack.c.l.b16 %v255
        %v400 = vunpack.c.l.b16 %v256
        %v401 = vunpack.c.l.b16 %v257
        %v402 = vunpack.c.l.b16 %v258
        %v403 = vunpack.c.l.b16 %v259
        %v404 = vunpack.c.l.b16 %v260
        %v405 = vunpack.c.l.b16 %v261
        %v406 = vunpack.c.l.b16 %v262
        %v407 = vunpack.c.l.b16 %v263
        %v408 = vunpack.c.l.b16 %v264
        %v409 = vunpack.c.l.b16 %v265
        %v410 = vunpack.c.l.b16 %v266
        %v411 = vunpack.c.l.b16 %v267
        %v412 = vunpack.c.l.b16 %v268
        %v413 = vunpack.c.l.b16 %v269
        %v414 = vunpack.c.l.b16 %v270
        %v415 = vunpack.c.l.b16 %v271
        %v416 = vunpack.c.l.b16 %v272
        %v417 = vunpack.c.l.b16 %v273
        %v418 = vunpack.c.l.b16 %v274
        %v419 = vunpack.c.l.b16 %v275
        %v420 = vpack.c.b16 %v389, %v388
        %v421 = vpack.c.b16 %v391, %v390
        %v422 = vpack.c.b16 %v393, %v392
        %v423 = vpack.c.b16 %v395, %v394
        %v424 = vpack.c.b16 %v397, %v396
        %v425 = vpack.c.b16 %v399, %v398
        %v426 = vpack.c.b16 %v401, %v400
        %v427 = vpack.c.b16 %v403, %v402
        %v428 = vpack.c.b16 %v405, %v404
        %v429 = vpack.c.b16 %v407, %v406
        %v430 = vpack.c.b16 %v409, %v408
        %v431 = vpack.c.b16 %v411, %v410
        %v432 = vpack.c.b16 %v413, %v412
        %v433 = vpack.c.b16 %v415, %v414
        %v434 = vpack.c.b16 %v417, %v416
        %v435 = vpack.c.b16 %v419, %v418
        %452 = vmatpush.bf16.msra.mxu0 %v427
        %453 = vmatpush.bf16.msra.mxu0 %v426
        %454 = vmatpush.bf16.msra.mxu0 %v425
        %455 = vmatpush.bf16.msra.mxu0 %v424
        %456 = vmatpush.bf16.msra.mxu0 %v423
        %457 = vmatpush.bf16.msra.mxu0 %v422
        %458 = vmatpush.bf16.msra.mxu0 %v421
        %459 = vmatpush.bf16.msra.mxu0 %v420
        %460 = vmatmul.bf16.gmra.mxu0 %v324
        %v461 = vpop.f32.mrf.mxu0
        %v462 = vadd.f32 0.0, %v461
        %v463 = vpop.f32.mrf.mxu0
        %v464 = vadd.f32 0.0, %v463
        %465 = vmatmul.bf16.gmra.mxu0 %v326
        %v466 = vpop.f32.mrf.mxu0
        %v467 = vadd.f32 0.0, %v466
        %v468 = vpop.f32.mrf.mxu0
        %v469 = vadd.f32 0.0, %v468
        %470 = vmatmul.bf16.gmra.mxu0 %v328
        %v471 = vpop.f32.mrf.mxu0
        %v472 = vadd.f32 0.0, %v471
        %v473 = vpop.f32.mrf.mxu0
        %v474 = vadd.f32 0.0, %v473
        %475 = vmatmul.bf16.gmra.mxu0 %v330
        %v476 = vpop.f32.mrf.mxu0
        %v477 = vadd.f32 0.0, %v476
        %v478 = vpop.f32.mrf.mxu0
        %v479 = vadd.f32 0.0, %v478
        %480 = vmatmul.bf16.gmra.mxu0 %v332
        %v481 = vpop.f32.mrf.mxu0
        %v482 = vadd.f32 0.0, %v481
        %v483 = vpop.f32.mrf.mxu0
        %v484 = vadd.f32 0.0, %v483
        %485 = vmatmul.bf16.gmra.mxu0 %v334
        %v486 = vpop.f32.mrf.mxu0
        %v487 = vadd.f32 0.0, %v486
        %v488 = vpop.f32.mrf.mxu0
        %v489 = vadd.f32 0.0, %v488
        %490 = vmatmul.bf16.gmra.mxu0 %v336
        %v491 = vpop.f32.mrf.mxu0
        %v492 = vadd.f32 0.0, %v491
        %v493 = vpop.f32.mrf.mxu0
        %v494 = vadd.f32 0.0, %v493
        %495 = vmatmul.bf16.gmra.mxu0 %v338
        %v496 = vpop.f32.mrf.mxu0
        %v497 = vadd.f32 0.0, %v496
        %v498 = vpop.f32.mrf.mxu0
        %v499 = vadd.f32 0.0, %v498
        %500 = vdwg.mxu0
        %501 = vmatpush.bf16.msra.mxu0 %v435
        %502 = vmatpush.bf16.msra.mxu0 %v434
        %503 = vmatpush.bf16.msra.mxu0 %v433
        %504 = vmatpush.bf16.msra.mxu0 %v432
        %505 = vmatpush.bf16.msra.mxu0 %v431
        %506 = vmatpush.bf16.msra.mxu0 %v430
        %507 = vmatpush.bf16.msra.mxu0 %v429
        %508 = vmatpush.bf16.msra.mxu0 %v428
        %509 = vmatmul.bf16.gmra.mxu0 %v325
        %v510 = vpop.f32.mrf.mxu0
        %v511 = vadd.f32 %v462, %v510
        %v512 = vpop.f32.mrf.mxu0
        %v513 = vadd.f32 %v464, %v512
        %514 = vmatmul.bf16.gmra.mxu0 %v327
        %v515 = vpop.f32.mrf.mxu0
        %v516 = vadd.f32 %v467, %v515
        %v517 = vpop.f32.mrf.mxu0
        %v518 = vadd.f32 %v469, %v517
        %519 = vmatmul.bf16.gmra.mxu0 %v329
        %v520 = vpop.f32.mrf.mxu0
        %v521 = vadd.f32 %v472, %v520
        %v522 = vpop.f32.mrf.mxu0
        %v523 = vadd.f32 %v474, %v522
        %524 = vmatmul.bf16.gmra.mxu0 %v331
        %v525 = vpop.f32.mrf.mxu0
        %v526 = vadd.f32 %v477, %v525
        %v527 = vpop.f32.mrf.mxu0
        %v528 = vadd.f32 %v479, %v527
        %529 = vmatmul.bf16.gmra.mxu0 %v333
        %v530 = vpop.f32.mrf.mxu0
        %v531 = vadd.f32 %v482, %v530
        %v532 = vpop.f32.mrf.mxu0
        %v533 = vadd.f32 %v484, %v532
        %534 = vmatmul.bf16.gmra.mxu0 %v335
        %v535 = vpop.f32.mrf.mxu0
        %v536 = vadd.f32 %v487, %v535
        %v537 = vpop.f32.mrf.mxu0
        %v538 = vadd.f32 %v489, %v537
        %539 = vmatmul.bf16.gmra.mxu0 %v337
        %v540 = vpop.f32.mrf.mxu0
        %v541 = vadd.f32 %v492, %v540
        %v542 = vpop.f32.mrf.mxu0
        %v543 = vadd.f32 %v494, %v542
        %544 = vmatmul.bf16.gmra.mxu0 %v339
        %v545 = vpop.f32.mrf.mxu0
        %v546 = vadd.f32 %v497, %v545
        %v547 = vpop.f32.mrf.mxu0
        %v548 = vadd.f32 %v499, %v547
        %549 = vdwg.mxu0
        %s550 = sshra.s32 %s227, 3
        %s551 = sand.u32 %s227, 7
        %s552 = smul.addr %s550, 4
        %s553 = scalar_lea.vmem [#allocation5], %s552
        %v554 = vld [vmem:[%s553] sm:$0xf]
        %v555 = vld [vmem:[%s553 + $0x4] sm:$0xf]
        %v556 = vld [vmem:[%s553 + $0x8] sm:$0xf]
        %v557 = vld [vmem:[%s553 + $0xc] sm:$0xf]
        %v558 = vld [vmem:[%s553 + $0x10] sm:$0xf]
        %v559 = vld [vmem:[%s553 + $0x14] sm:$0xf]
        %v560 = vld [vmem:[%s553 + $0x18] sm:$0xf]
        %v561 = vld [vmem:[%s553 + $0x1c] sm:$0xf]
        %v562 = vld [vmem:[%s553 + $0x20] sm:$0xf]
        %v563 = vld [vmem:[%s553 + $0x24] sm:$0xf]
        %v564 = vld [vmem:[%s553 + $0x28] sm:$0xf]
        %v565 = vld [vmem:[%s553 + $0x2c] sm:$0xf]
        %v566 = vld [vmem:[%s553 + $0x30] sm:$0xf]
        %v567 = vld [vmem:[%s553 + $0x34] sm:$0xf]
        %v568 = vld [vmem:[%s553 + $0x38] sm:$0xf]
        %v569 = vld [vmem:[%s553 + $0x3c] sm:$0xf]
        %v570 = vld [vmem:[#allocation7] sm:$0xf]
        %v571 = vld [vmem:[#allocation7 + $0x4] sm:$0xf]
        %v572 = vld [vmem:[#allocation7 + $0x8] sm:$0xf]
        %v573 = vld [vmem:[#allocation7 + $0xc] sm:$0xf]
        %v574 = vld [vmem:[#allocation7 + $0x10] sm:$0xf]
        %v575 = vld [vmem:[#allocation7 + $0x14] sm:$0xf]
        %v576 = vld [vmem:[#allocation7 + $0x18] sm:$0xf]
        %v577 = vld [vmem:[#allocation7 + $0x1c] sm:$0xf]
        %v578 = vld [vmem:[#allocation7 + $0x20] sm:$0xf]
        %v579 = vld [vmem:[#allocation7 + $0x24] sm:$0xf]
        %v580 = vld [vmem:[#allocation7 + $0x28] sm:$0xf]
        %v581 = vld [vmem:[#allocation7 + $0x2c] sm:$0xf]
        %v582 = vld [vmem:[#allocation7 + $0x30] sm:$0xf]
        %v583 = vld [vmem:[#allocation7 + $0x34] sm:$0xf]
        %v584 = vld [vmem:[#allocation7 + $0x38] sm:$0xf]
        %v585 = vld [vmem:[#allocation7 + $0x3c] sm:$0xf]
        %v586 = vpack.c.bf16 %v513, %v511
        %v587 = vpack.c.bf16 %v518, %v516
        %v588 = vpack.c.bf16 %v523, %v521
        %v589 = vpack.c.bf16 %v528, %v526
        %v590 = vpack.c.bf16 %v533, %v531
        %v591 = vpack.c.bf16 %v538, %v536
        %v592 = vpack.c.bf16 %v543, %v541
        %v593 = vpack.c.bf16 %v548, %v546
        %v594 = vld [vmem:[#allocation7 + $0x40] sm:$0xf]
        %v595 = vld [vmem:[#allocation7 + $0x44] sm:$0xf]
        %v596 = vld [vmem:[#allocation7 + $0x48] sm:$0xf]
        %v597 = vld [vmem:[#allocation7 + $0x4c] sm:$0xf]
        %v598 = vld [vmem:[#allocation7 + $0x50] sm:$0xf]
        %v599 = vld [vmem:[#allocation7 + $0x54] sm:$0xf]
        %v600 = vld [vmem:[#allocation7 + $0x58] sm:$0xf]
        %v601 = vld [vmem:[#allocation7 + $0x5c] sm:$0xf]
        %v602 = vld [vmem:[#allocation7 + $0x60] sm:$0xf]
        %v603 = vld [vmem:[#allocation7 + $0x64] sm:$0xf]
        %v604 = vld [vmem:[#allocation7 + $0x68] sm:$0xf]
        %v605 = vld [vmem:[#allocation7 + $0x6c] sm:$0xf]
        %v606 = vld [vmem:[#allocation7 + $0x70] sm:$0xf]
        %v607 = vld [vmem:[#allocation7 + $0x74] sm:$0xf]
        %v608 = vld [vmem:[#allocation7 + $0x78] sm:$0xf]
        %v609 = vld [vmem:[#allocation7 + $0x7c] sm:$0xf]
        %v626 = vunpack.c.l.b16 %v594
        %v627 = vunpack.c.l.b16 %v595
        %v628 = vunpack.c.l.b16 %v596
        %v629 = vunpack.c.l.b16 %v597
        %v630 = vunpack.c.l.b16 %v598
        %v631 = vunpack.c.l.b16 %v599
        %v632 = vunpack.c.l.b16 %v600
        %v633 = vunpack.c.l.b16 %v601
        %v634 = vunpack.c.l.b16 %v602
        %v635 = vunpack.c.l.b16 %v603
        %v636 = vunpack.c.l.b16 %v604
        %v637 = vunpack.c.l.b16 %v605
        %v638 = vunpack.c.l.b16 %v606
        %v639 = vunpack.c.l.b16 %v607
        %v640 = vunpack.c.l.b16 %v608
        %v641 = vunpack.c.l.b16 %v609
        %v642 = vpack.c.b16 %v627, %v626
        %v643 = vpack.c.b16 %v629, %v628
        %v644 = vpack.c.b16 %v631, %v630
        %v645 = vpack.c.b16 %v633, %v632
        %v646 = vpack.c.b16 %v635, %v634
        %v647 = vpack.c.b16 %v637, %v636
        %v648 = vpack.c.b16 %v639, %v638
        %v649 = vpack.c.b16 %v641, %v640
        %658 = vmatpush.bf16.msra.mxu0 %v649
        %659 = vmatpush.bf16.msra.mxu0 %v648
        %660 = vmatpush.bf16.msra.mxu0 %v647
        %661 = vmatpush.bf16.msra.mxu0 %v646
        %662 = vmatpush.bf16.msra.mxu0 %v645
        %663 = vmatpush.bf16.msra.mxu0 %v644
        %664 = vmatpush.bf16.msra.mxu0 %v643
        %665 = vmatpush.bf16.msra.mxu0 %v642
        %666 = vmatmul.bf16.gmra.mxu0 %v586
        %v667 = vpop.f32.mrf.mxu0
        %v668 = vadd.f32 0.0, %v667
        %v669 = vpop.f32.mrf.mxu0
        %v670 = vadd.f32 0.0, %v669
        %671 = vmatmul.bf16.gmra.mxu0 %v587
        %v672 = vpop.f32.mrf.mxu0
        %v673 = vadd.f32 0.0, %v672
        %v674 = vpop.f32.mrf.mxu0
        %v675 = vadd.f32 0.0, %v674
        %676 = vmatmul.bf16.gmra.mxu0 %v588
        %v677 = vpop.f32.mrf.mxu0
        %v678 = vadd.f32 0.0, %v677
        %v679 = vpop.f32.mrf.mxu0
        %v680 = vadd.f32 0.0, %v679
        %681 = vmatmul.bf16.gmra.mxu0 %v589
        %v682 = vpop.f32.mrf.mxu0
        %v683 = vadd.f32 0.0, %v682
        %v684 = vpop.f32.mrf.mxu0
        %v685 = vadd.f32 0.0, %v684
        %686 = vmatmul.bf16.gmra.mxu0 %v590
        %v687 = vpop.f32.mrf.mxu0
        %v688 = vadd.f32 0.0, %v687
        %v689 = vpop.f32.mrf.mxu0
        %v690 = vadd.f32 0.0, %v689
        %691 = vmatmul.bf16.gmra.mxu0 %v591
        %v692 = vpop.f32.mrf.mxu0
        %v693 = vadd.f32 0.0, %v692
        %v694 = vpop.f32.mrf.mxu0
        %v695 = vadd.f32 0.0, %v694
        %696 = vmatmul.bf16.gmra.mxu0 %v592
        %v697 = vpop.f32.mrf.mxu0
        %v698 = vadd.f32 0.0, %v697
        %v699 = vpop.f32.mrf.mxu0
        %v700 = vadd.f32 0.0, %v699
        %701 = vmatmul.bf16.gmra.mxu0 %v593
        %v702 = vpop.f32.mrf.mxu0
        %v703 = vadd.f32 0.0, %v702
        %v704 = vpop.f32.mrf.mxu0
        %v705 = vadd.f32 0.0, %v704
        %706 = vdwg.mxu0
        %v723 = vunpack.c.l.b16 %v554
        %v724 = vunpack.c.l.b16 %v555
        %v725 = vunpack.c.l.b16 %v556
        %v726 = vunpack.c.l.b16 %v557
        %v727 = vunpack.c.l.b16 %v558
        %v728 = vunpack.c.l.b16 %v559
        %v729 = vunpack.c.l.b16 %v560
        %v730 = vunpack.c.l.b16 %v561
        %v731 = vunpack.c.l.b16 %v562
        %v732 = vunpack.c.l.b16 %v563
        %v733 = vunpack.c.l.b16 %v564
        %v734 = vunpack.c.l.b16 %v565
        %v735 = vunpack.c.l.b16 %v566
        %v736 = vunpack.c.l.b16 %v567
        %v737 = vunpack.c.l.b16 %v568
        %v738 = vunpack.c.l.b16 %v569
        %v739 = vpack.c.b16 %v724, %v723
        %v740 = vpack.c.b16 %v726, %v725
        %v741 = vpack.c.b16 %v728, %v727
        %v742 = vpack.c.b16 %v730, %v729
        %v743 = vpack.c.b16 %v732, %v731
        %v744 = vpack.c.b16 %v734, %v733
        %v745 = vpack.c.b16 %v736, %v735
        %v746 = vpack.c.b16 %v738, %v737
        %v771 = vunpack.c.l.b16 %v570
        %v772 = vunpack.c.l.b16 %v571
        %v773 = vunpack.c.l.b16 %v572
        %v774 = vunpack.c.l.b16 %v573
        %v775 = vunpack.c.l.b16 %v574
        %v776 = vunpack.c.l.b16 %v575
        %v777 = vunpack.c.l.b16 %v576
        %v778 = vunpack.c.l.b16 %v577
        %v779 = vunpack.c.l.b16 %v578
        %v780 = vunpack.c.l.b16 %v579
        %v781 = vunpack.c.l.b16 %v580
        %v782 = vunpack.c.l.b16 %v581
        %v783 = vunpack.c.l.b16 %v582
        %v784 = vunpack.c.l.b16 %v583
        %v785 = vunpack.c.l.b16 %v584
        %v786 = vunpack.c.l.b16 %v585
        %v787 = vpack.c.b16 %v772, %v771
        %v788 = vpack.c.b16 %v774, %v773
        %v789 = vpack.c.b16 %v776, %v775
        %v790 = vpack.c.b16 %v778, %v777
        %v791 = vpack.c.b16 %v780, %v779
        %v792 = vpack.c.b16 %v782, %v781
        %v793 = vpack.c.b16 %v784, %v783
        %v794 = vpack.c.b16 %v786, %v785
        %803 = vmatpush.bf16.msra.mxu0 %v794
        %804 = vmatpush.bf16.msra.mxu0 %v793
        %805 = vmatpush.bf16.msra.mxu0 %v792
        %806 = vmatpush.bf16.msra.mxu0 %v791
        %807 = vmatpush.bf16.msra.mxu0 %v790
        %808 = vmatpush.bf16.msra.mxu0 %v789
        %809 = vmatpush.bf16.msra.mxu0 %v788
        %810 = vmatpush.bf16.msra.mxu0 %v787
        %811 = vmatmul.bf16.gmra.mxu0 %v739
        %v812 = vpop.f32.mrf.mxu0
        %v813 = vadd.f32 %v668, %v812
        %v814 = vpop.f32.mrf.mxu0
        %v815 = vadd.f32 %v670, %v814
        %816 = vmatmul.bf16.gmra.mxu0 %v740
        %v817 = vpop.f32.mrf.mxu0
        %v818 = vadd.f32 %v673, %v817
        %v819 = vpop.f32.mrf.mxu0
        %v820 = vadd.f32 %v675, %v819
        %821 = vmatmul.bf16.gmra.mxu0 %v741
        %v822 = vpop.f32.mrf.mxu0
        %v823 = vadd.f32 %v678, %v822
        %v824 = vpop.f32.mrf.mxu0
        %v825 = vadd.f32 %v680, %v824
        %826 = vmatmul.bf16.gmra.mxu0 %v742
        %v827 = vpop.f32.mrf.mxu0
        %v828 = vadd.f32 %v683, %v827
        %v829 = vpop.f32.mrf.mxu0
        %v830 = vadd.f32 %v685, %v829
        %831 = vmatmul.bf16.gmra.mxu0 %v743
        %v832 = vpop.f32.mrf.mxu0
        %v833 = vadd.f32 %v688, %v832
        %v834 = vpop.f32.mrf.mxu0
        %v835 = vadd.f32 %v690, %v834
        %836 = vmatmul.bf16.gmra.mxu0 %v744
        %v837 = vpop.f32.mrf.mxu0
        %v838 = vadd.f32 %v693, %v837
        %v839 = vpop.f32.mrf.mxu0
        %v840 = vadd.f32 %v695, %v839
        %841 = vmatmul.bf16.gmra.mxu0 %v745
        %v842 = vpop.f32.mrf.mxu0
        %v843 = vadd.f32 %v698, %v842
        %v844 = vpop.f32.mrf.mxu0
        %v845 = vadd.f32 %v700, %v844
        %846 = vmatmul.bf16.gmra.mxu0 %v746
        %v847 = vpop.f32.mrf.mxu0
        %v848 = vadd.f32 %v703, %v847
        %v849 = vpop.f32.mrf.mxu0
        %v850 = vadd.f32 %v705, %v849
        %851 = vdwg.mxu0
        %v852 = vmax.f32 %v813, 0.0
        %v853 = vmax.f32 %v815, 0.0
        %v854 = vmax.f32 %v818, 0.0
        %v855 = vmax.f32 %v820, 0.0
        %v856 = vmax.f32 %v823, 0.0
        %v857 = vmax.f32 %v825, 0.0
        %v858 = vmax.f32 %v828, 0.0
        %v859 = vmax.f32 %v830, 0.0
        %v860 = vmax.f32 %v833, 0.0
        %v861 = vmax.f32 %v835, 0.0
        %v862 = vmax.f32 %v838, 0.0
        %v863 = vmax.f32 %v840, 0.0
        %v864 = vmax.f32 %v843, 0.0
        %v865 = vmax.f32 %v845, 0.0
        %v866 = vmax.f32 %v848, 0.0
        %v867 = vmax.f32 %v850, 0.0
        %v868 = vpack.c.bf16 %v852, %v852
        %v869 = vpack.c.bf16 %v853, %v853
        %v870 = vpack.c.bf16 %v854, %v854
        %v871 = vpack.c.bf16 %v855, %v855
        %v872 = vpack.c.bf16 %v856, %v856
        %v873 = vpack.c.bf16 %v857, %v857
        %v874 = vpack.c.bf16 %v858, %v858
        %v875 = vpack.c.bf16 %v859, %v859
        %v876 = vpack.c.bf16 %v860, %v860
        %v877 = vpack.c.bf16 %v861, %v861
        %v878 = vpack.c.bf16 %v862, %v862
        %v879 = vpack.c.bf16 %v863, %v863
        %v880 = vpack.c.bf16 %v864, %v864
        %v881 = vpack.c.bf16 %v865, %v865
        %v882 = vpack.c.bf16 %v866, %v866
        %v883 = vpack.c.bf16 %v867, %v867
        %884 = vst [vmem:[%s224] sm:$0xf] %v868
        %885 = vst [vmem:[%s224 + $0x4] sm:$0xf] %v869
        %886 = vst [vmem:[%s224 + $0x8] sm:$0xf] %v870
        %887 = vst [vmem:[%s224 + $0xc] sm:$0xf] %v871
        %888 = vst [vmem:[%s224 + $0x10] sm:$0xf] %v872
        %889 = vst [vmem:[%s224 + $0x14] sm:$0xf] %v873
        %890 = vst [vmem:[%s224 + $0x18] sm:$0xf] %v874
        %891 = vst [vmem:[%s224 + $0x1c] sm:$0xf] %v875
        %892 = vst [vmem:[%s224 + $0x20] sm:$0xf] %v876
        %893 = vst [vmem:[%s224 + $0x24] sm:$0xf] %v877
        %894 = vst [vmem:[%s224 + $0x28] sm:$0xf] %v878
        %895 = vst [vmem:[%s224 + $0x2c] sm:$0xf] %v879
        %896 = vst [vmem:[%s224 + $0x30] sm:$0xf] %v880
        %897 = vst [vmem:[%s224 + $0x34] sm:$0xf] %v881
        %898 = vst [vmem:[%s224 + $0x38] sm:$0xf] %v882
        %899 = vst [vmem:[%s224 + $0x3c] sm:$0xf] %v883
        %s900 = sand.u32 %s97, 1
        %s901 = scalar_lea.sflag [#allocation4], %s900
        %s902 = sand.u32 %s97, 1
        %s903 = smul.addr %s902, 64
        %s904 = scalar_lea.vmem [#allocation8], %s903
        // Predicated region
        $region45: #{tpu_custom_call.1} parent=31 // pred_check
          %p905 = pneg %p107
        $region46: #{tpu_custom_call.1} parent=31 // pred_check_branch
          %907 = sbr.rel (%p905) target = $region48
        $region47: #{tpu_custom_call.1} parent=31 // pred_region
          %s908 = smul.u32 16, %s21
          %910 = vsyncadd %s901, 0
          %s911 = smul.addr %s908, 4
          %s912 = scalar_lea.hbm %s3, %s911
          %s913 = sshll.u32 %s904, 4
          %s914 = int_to_ptr.vmem [resolvable:$true] %s913
          %s915 = sshll.u32 %s912, 4
          %s916 = int_to_ptr.hbm [resolvable:$true] %s915
          %921 = dma.vmem_to_hbm [thread:$0]  %s914, 1024, %s916, %s901, 64, 64, 4
        $region48: #{tpu_custom_call.1} parent=31 // pred_fallthru
          _
      $region32: #{tpu_custom_call.1} parent=5 // pred_fallthru
        _
      %p922 = scmp.le.s32.totalorder 2, %s16
      // Predicated region
      $region49: #{tpu_custom_call.1} parent=5 // pred_check
        %p923 = pneg %p922
      $region50: #{tpu_custom_call.1} parent=5 // pred_check_branch
        %925 = sbr.rel (%p923) target = $region52
      $region51: #{tpu_custom_call.1} parent=5 // pred_region
        %s926 = ssub.s32 %s16, 2
        // Predicated region
        $region53: #{tpu_custom_call.1} parent=51 // pred_check
          %p927 = pneg %p113
        $region54: #{tpu_custom_call.1} parent=51 // pred_check_branch
          %929 = sbr.rel (%p927) target = $region56
        $region55: #{tpu_custom_call.1} parent=51 // pred_region
          %s930 = sand.u32 %s98, 1
          %s931 = scalar_lea.sflag [#allocation4], %s930
          %s932 = sand.u32 %s98, 1
          %s933 = smul.addr %s932, 64
          %s934 = scalar_lea.vmem [#allocation8], %s933
          %936 = dma.done %s931, 1024
        $region56: #{tpu_custom_call.1} parent=51 // pred_fallthru
          _
      $region52: #{tpu_custom_call.1} parent=5 // pred_fallthru
        _
    $region6: #{tpu_custom_call.1} parent=1 // loop_footer
      %s20 = sadd.s32 1, %s16
    $region7: #{tpu_custom_call.1} parent=1 // loop_footer_branch
      %15 = sbr.rel target = $region3
    $region8: #{tpu_custom_call.1} parent=1 // loop_exit
      _
    %937 = vsyncpa [#allocation3], 1
    %s938 = scalar_lea.sflag [#allocation3], 1
    %939 = vsyncpa %s938, 1
    %940 = vsyncpa [#allocation6], 1
    %941 = vsyncpa [#allocation4], 1
    %s942 = scalar_lea.sflag [#allocation4], 1
    %943 = vsyncpa %s942, 1

</llo_original>
